<compile_context>
chip_gen: v7x
topology: tpu7x:2x2x1
jax: 0.10.0
libtpu: 0.0.40
codegen_flags: <defaults>
</compile_context>

<pallas_src>
import math
import functools

import jax
import jax.numpy as jnp
from jax.experimental import pallas as pl
from jax.experimental.pallas import tpu as pltpu


# ----------------------------- Pallas kernel -------------------------------

def nfnet_block_kernel(x_ref, w1_ref, b1_ref, w2_ref, b2_ref, w3_ref, b3_ref,
                       w4_ref, b4_ref, out_ref, *, alpha, beta):
    """Bt images per grid step; activations are row-packed lane-dense slabs."""
    Bt, HR, Lin = x_ref.shape
    M = Bt * HR
    x = x_ref[...].reshape(M, Lin)                           # (M, P*Cin) f32

    # block_seq input: ReLU(inputs / beta)
    h0 = jnp.maximum(x * (1.0 / beta), 0.0)

    # 1x1 conv (Cin -> C4): one block-diagonal matmul over the P = R*W packed
    # pixels; bf16 operands, f32 accumulation, bias + ReLU fused.
    h1 = jnp.maximum(
        jnp.dot(h0.astype(jnp.bfloat16), w1_ref[...],
                preferred_element_type=jnp.float32) + b1_ref[...], 0.0)

    def conv3x3(h, wf_ref, b_ref):
        # 3x3 SAME conv as ONE fused matmul (K = 3 * lane width).  LHS lanes =
        # [slab row above | slab row | slab row below]; vertical zero padding
        # is the per-image zero-row concat, horizontal padding + ky routing
        # live inside the fused band weight wf.
        Lc = h.shape[-1]
        h3d = h.reshape(Bt, HR, Lc)                          # shift in f32
        zero = jnp.zeros((Bt, 1, Lc), h.dtype)
        up = jnp.concatenate([zero, h3d[:, :-1, :]], axis=1)   # slab row r-1
        dn = jnp.concatenate([h3d[:, 1:, :], zero], axis=1)    # slab row r+1
        cat = jnp.concatenate([up, h3d, dn], axis=-1).reshape(M, 3 * Lc)
        return jnp.dot(cat.astype(jnp.bfloat16), wf_ref[...],
                       preferred_element_type=jnp.float32) + b_ref[...]

    h2 = jnp.maximum(conv3x3(h1, w2_ref, b2_ref), 0.0)
    h3 = jnp.maximum(conv3x3(h2, w3_ref, b3_ref), 0.0)

    # 1x1 conv (C4 -> Cout): block-diagonal matmul.
    y4 = jnp.dot(h3.astype(jnp.bfloat16), w4_ref[...],
                 preferred_element_type=jnp.float32) + b4_ref[...]

    # outputs = alpha * block_seq(inputs / beta) + inputs   (no projection)
    out_ref[...] = (alpha * y4 + x).reshape(Bt, HR, Lin)    # lane-dense store


# ------------------------------ JAX glue ------------------------------------

def standardize_weight(w, gain=1.712858):
    """Conv2d_modified weight standardization. w: (O, I, kh, kw)."""
    O, I, kh, kw = w.shape
    mean = jnp.mean(w, axis=(1, 2, 3), keepdims=True)
    wc = w - mean
    # torch .std(dim=1) on the flattened (O, -1) view is unbiased (ddof=1)
    std = jnp.std(wc.reshape(O, -1), axis=1, ddof=1).reshape(O, 1, 1, 1) + 1e-5
    N = math.sqrt(kh * kw * I)
    return gain * wc / std / N


def kaiming_normal(key, shape):
    # nn.init.kaiming_normal_(nonlinearity='relu'): std = sqrt(2 / fan_in)
    O, I, kh, kw = shape
    fan_in = I * kh * kw
    return jax.random.normal(key, shape, jnp.float32) * math.sqrt(2.0 / fan_in)


def conv_bias(key, shape_w):
    O, I, kh, kw = shape_w
    fan_in = I * kh * kw
    bound = 1.0 / math.sqrt(fan_in)
    return jax.random.uniform(key, (O,), jnp.float32, -bound, bound)


def init_nfnet_block_params(key, in_channel, filters):
    c4 = int(filters / 4)
    shapes = [(c4, in_channel, 1, 1), (c4, c4, 3, 3),
              (c4, c4, 3, 3), (filters, c4, 1, 1)]
    keys = jax.random.split(key, 2 * len(shapes))
    params = []
    for i, s in enumerate(shapes):
        w = kaiming_normal(keys[2 * i], s)
        b = conv_bias(keys[2 * i + 1], s)
        params.append((w, b))
    return params


def _pick_row_pack(H, W, C4, target_lanes=128):
    """Image rows packed per slab row so the intermediate lane width >= 128."""
    r = max(1, -(-target_lanes // (W * C4)))
    while H % r:
        r -= 1
    return r


def _pick_block_batch(B, rows_per_image, target_rows=128):
    """Images per grid step: aim for >= target_rows MXU rows per step, but keep
    >= 2 grid steps when possible so both v7x TensorCores get work."""
    bt = min(B, max(1, -(-target_rows // rows_per_image)))
    while B % bt:
        bt -= 1
    if bt == B and B > 1:
        bt = max(1, B // 2)
        while B % bt:
            bt -= 1
    return bt


def _pack_weights(params, W, R):
    """Standardize weights and repack them for the row-packed lane-dense layout.

    Slab layout per slab row: P = R*W pixels, lanes = [p*C + c] with
    p = (packed_row_index r)*W + x.  1x1 convs -> kron(I_P, w.T).  Each 3x3
    conv -> a single fused (3*R*W*Cin, R*W*Cout) matrix acting on the lane
    concat [slab row above | slab row | slab row below]."""
    (w1, b1), (w2, b2), (w3, b3), (w4, b4) = params
    w1s = standardize_weight(w1)[:, :, 0, 0]       # (C4, Cin)
    w2s = standardize_weight(w2)                   # (C4, C4, 3, 3)
    w3s = standardize_weight(w3)                   # (C4, C4, 3, 3)
    w4s = standardize_weight(w4)[:, :, 0, 0]       # (Cout, C4)
    C4, Cin = w1s.shape
    Cout = w4s.shape[0]
    P = R * W

    eye_p = jnp.eye(P, dtype=jnp.float32)
    w1k = jnp.kron(eye_p, w1s.T)                   # (P*Cin, P*C4)
    w4k = jnp.kron(eye_p, w4s.T)                   # (P*C4, P*Cout)

    def within_row_band(ws, ky):
        # (W*I, W*O) banded matrix for one ky; horizontal SAME padding baked in
        # via shifted identities.
        I_, O_ = ws.shape[1], ws.shape[0]
        m = jnp.zeros((W * I_, W * O_), jnp.float32)
        for kx in range(3):
            shift = jnp.eye(W, k=-(kx - 1), dtype=jnp.float32)  # S[xin,xout]=1 iff xin==xout+kx-1
            m = m + jnp.kron(shift, ws[:, :, ky, kx].T)
        return m

    def fused_band(ws):
        # Fused weight for the lane concat [above | cur | below], each section
        # of width R*W*I.  Output image row (r*R + j) taps input image row
        # (r*R + j + ky - 1), routed to the right (section, packed-row) block.
        I_, O_ = ws.shape[1], ws.shape[0]
        WI, WO = W * I_, W * O_
        bands = [within_row_band(ws, ky) for ky in range(3)]
        wf = jnp.zeros((3 * R * WI, R * WO), jnp.float32)
        for j in range(R):                         # output packed-row index
            for ky in range(3):
                src = j + (ky - 1)                 # input packed-row offset
                if src < 0:
                    section, blk = 0, R - 1        # slab row above, last packed row
                elif src >= R:
                    section, blk = 2, 0            # slab row below, first packed row
                else:
                    section, blk = 1, src          # current slab row
                r0 = (section * R + blk) * WI
                c0 = j * WO
                wf = wf.at[r0:r0 + WI, c0:c0 + WO].add(bands[ky])
        return wf

    wf2 = fused_band(w2s)
    wf3 = fused_band(w3s)

    b1t = jnp.tile(b1, P).reshape(1, P * C4)
    b2t = jnp.tile(b2, P).reshape(1, P * C4)
    b3t = jnp.tile(b3, P).reshape(1, P * C4)
    b4t = jnp.tile(b4, P).reshape(1, P * Cout)

    bf16 = jnp.bfloat16
    return (w1k.astype(bf16), b1t, wf2.astype(bf16), b2t,
            wf3.astype(bf16), b3t, w4k.astype(bf16), b4t)


def nfnet_block_forward(x_nchw, params, alpha, beta):
    """x_nchw: (B, C, H, W) float32. Returns (B, C, H, W)."""
    B, Cin, H, W = x_nchw.shape
    C4 = params[0][0].shape[0]
    Cout = params[3][0].shape[0]
    assert Cin == Cout, "projection_shortcut=None config requires in_channel == filters"

    R = _pick_row_pack(H, W, C4)       # image rows per slab row (lanes >= 128)
    HR = H // R
    P = R * W
    Bt = _pick_block_batch(B, HR)      # images per grid step
    n_steps = B // Bt

    packed = _pack_weights(params, W, R)

    # Row-packed lane-dense presentation: one fused transpose+reshape per side.
    x_slab = (jnp.transpose(x_nchw, (0, 2, 3, 1))
              .astype(jnp.float32)
              .reshape(B, HR, P * Cin))

    kernel = functools.partial(nfnet_block_kernel,
                               alpha=float(alpha), beta=float(beta))

    def const_spec(arr):
        # Whole (small) weight/bias resident in VMEM; constant block index so it
        # is fetched once for the whole grid.
        return pl.BlockSpec(arr.shape, lambda b: (0, 0))

    # Cost hint so XLA can overlap the wrapper-side transposes with the kernel.
    M = Bt * HR
    flops_step = 2 * M * (P * Cin * P * C4
                          + 2 * (3 * P * C4) * (P * C4)
                          + P * C4 * P * Cout)
    weight_bytes = sum(int(w.size) * w.dtype.itemsize for w in packed)
    cost = pl.CostEstimate(
        flops=int(flops_step * n_steps),
        transcendentals=0,
        bytes_accessed=int(x_slab.size * 4 + B * HR * P * Cout * 4 + weight_bytes))

    out_slab = pl.pallas_call(
        kernel,
        out_shape=jax.ShapeDtypeStruct((B, HR, P * Cout), jnp.float32),
        grid=(n_steps,),
        in_specs=[pl.BlockSpec((Bt, HR, P * Cin), lambda b: (b, 0, 0)),
                  const_spec(packed[0]), const_spec(packed[1]),
                  const_spec(packed[2]), const_spec(packed[3]),
                  const_spec(packed[4]), const_spec(packed[5]),
                  const_spec(packed[6]), const_spec(packed[7])],
        out_specs=pl.BlockSpec((Bt, HR, P * Cout), lambda b: (b, 0, 0)),
        compiler_params=pltpu.CompilerParams(
            dimension_semantics=("parallel",),
            vmem_limit_bytes=32 * 1024 * 1024),
        cost_estimate=cost,
    )(x_slab, *packed)

    out_nhwc = out_slab.reshape(B, H, W, Cout)
    return jnp.transpose(out_nhwc, (0, 3, 1, 2))


# --------------------------- pure-JAX reference ------------------------------

def _conv_nhwc(x, w_oihw, b, padding):
    w_hwio = jnp.transpose(w_oihw, (2, 3, 1, 0))
    y = jax.lax.conv_general_dilated(
        x, w_hwio, window_strides=(1, 1), padding=padding,
        dimension_numbers=('NHWC', 'HWIO', 'NHWC'))
    return y + b.reshape(1, 1, 1, -1)


def nfnet_block_ref(x_nchw, params, alpha, beta):
    (w1, b1), (w2, b2), (w3, b3), (w4, b4) = params
    x = jnp.transpose(x_nchw, (0, 2, 3, 1))
    h = jnp.maximum(x / beta, 0.0)
    h = _conv_nhwc(h, standardize_weight(w1), b1, 'VALID')
    h = jnp.maximum(h, 0.0)
    h = _conv_nhwc(h, standardize_weight(w2), b2, 'SAME')
    h = jnp.maximum(h, 0.0)
    h = _conv_nhwc(h, standardize_weight(w3), b3, 'SAME')
    h = jnp.maximum(h, 0.0)
    h = _conv_nhwc(h, standardize_weight(w4), b4, 'VALID')
    out = alpha * h + x
    return jnp.transpose(out, (0, 3, 1, 2))


# --------------------------------- main --------------------------------------

if __name__ == "__main__":
    key = jax.random.PRNGKey(0)
    k_x, k_p = jax.random.split(key)

    # B=32 so that with row packing (R=2 -> 8 slab rows/image) each of the two
    # grid steps still feeds >= 128 MXU rows; still a tiny (1 MiB) workload.
    B, C, H, W = 32, 16, 16, 16        # in_channel == filters -> no projection
    filters = 16
    alpha, beta = 0.2, 0.8

    x = jax.random.normal(k_x, (B, C, H, W), jnp.float32)
    params = init_nfnet_block_params(k_p, in_channel=C, filters=filters)

    out = jax.block_until_ready(nfnet_block_forward(x, params, alpha, beta))

    ref = jax.block_until_ready(nfnet_block_ref(x, params, alpha, beta))
    assert out.shape == (B, filters, H, W)
    max_err = float(jnp.max(jnp.abs(out - ref)))
    # bf16 matmul operands (f32 accumulation) vs f32 reference -> loosened tol.
    assert jnp.allclose(out, ref, atol=5e-2, rtol=5e-2), f"max_err={max_err}"

    print("KERNEL_OK")
</pallas_src>

<mosaic_0001>
module attributes {stable_mosaic.version = 11 : i64} {
  func.func @nfnet_block_kernel(%arg0: i32, %arg1: memref<16x8x512xf32, #tpu.memory_space<vmem>>, %arg2: memref<512x128xbf16, #tpu.memory_space<vmem>>, %arg3: memref<1x128xf32, #tpu.memory_space<vmem>>, %arg4: memref<384x128xbf16, #tpu.memory_space<vmem>>, %arg5: memref<1x128xf32, #tpu.memory_space<vmem>>, %arg6: memref<384x128xbf16, #tpu.memory_space<vmem>>, %arg7: memref<1x128xf32, #tpu.memory_space<vmem>>, %arg8: memref<128x512xbf16, #tpu.memory_space<vmem>>, %arg9: memref<1x512xf32, #tpu.memory_space<vmem>>, %arg10: memref<16x8x512xf32, #tpu.memory_space<vmem>>) attributes {dimension_semantics = [#tpu.dimension_semantics<parallel>], iteration_bounds = array<i64: 2>, scalar_prefetch = 0 : i64, scratch_operands = 0 : i64, tpu.core_type = #tpu.core_type<tc>, window_params = [{transform_indices = @transform_0, window_bounds = array<i64: 16, 8, 512>}, {pipeline_mode = #tpu.pipeline_mode<synchronous>, transform_indices = @transform_1, window_bounds = array<i64: 512, 128>}, {pipeline_mode = #tpu.pipeline_mode<synchronous>, transform_indices = @transform_2, window_bounds = array<i64: 1, 128>}, {pipeline_mode = #tpu.pipeline_mode<synchronous>, transform_indices = @transform_3, window_bounds = array<i64: 384, 128>}, {pipeline_mode = #tpu.pipeline_mode<synchronous>, transform_indices = @transform_4, window_bounds = array<i64: 1, 128>}, {pipeline_mode = #tpu.pipeline_mode<synchronous>, transform_indices = @transform_5, window_bounds = array<i64: 384, 128>}, {pipeline_mode = #tpu.pipeline_mode<synchronous>, transform_indices = @transform_6, window_bounds = array<i64: 1, 128>}, {pipeline_mode = #tpu.pipeline_mode<synchronous>, transform_indices = @transform_7, window_bounds = array<i64: 128, 512>}, {pipeline_mode = #tpu.pipeline_mode<synchronous>, transform_indices = @transform_8, window_bounds = array<i64: 1, 512>}, {transform_indices = @transform_9, window_bounds = array<i64: 16, 8, 512>}]} {
    %c0 = arith.constant 0 : index
    %c0_0 = arith.constant 0 : index
    %c0_1 = arith.constant 0 : index
    %0 = vector.load %arg1[%c0, %c0_0, %c0_1] : memref<16x8x512xf32, #tpu.memory_space<vmem>>, vector<16x8x512xf32>
    %1 = vector.shape_cast %0 : vector<16x8x512xf32> to vector<128x512xf32>
    %cst = arith.constant 1.250000e+00 : f32
    %2 = vector.broadcast %cst : f32 to vector<128x512xf32>
    %3 = arith.mulf %1, %2 : vector<128x512xf32>
    %cst_2 = arith.constant 0.000000e+00 : f32
    %4 = vector.broadcast %cst_2 : f32 to vector<128x512xf32>
    %5 = arith.maximumf %3, %4 : vector<128x512xf32>
    %6 = arith.truncf %5 : vector<128x512xf32> to vector<128x512xbf16>
    %c0_3 = arith.constant 0 : index
    %c0_4 = arith.constant 0 : index
    %7 = vector.load %arg2[%c0_3, %c0_4] : memref<512x128xbf16, #tpu.memory_space<vmem>>, vector<512x128xbf16>
    %cst_5 = arith.constant dense<0.000000e+00> : vector<128x128xf32>
    %8 = tpu.matmul %6, %7, %cst_5 {dimension_numbers = #tpu.dot_dimension_numbers<[1], [0], [0], [1], [0, 0, 1, 1], [], []>} : vector<128x512xbf16>, vector<512x128xbf16>, vector<128x128xf32> -> vector<128x128xf32>
    %c0_6 = arith.constant 0 : index
    %c0_7 = arith.constant 0 : index
    %9 = vector.load %arg3[%c0_6, %c0_7] : memref<1x128xf32, #tpu.memory_space<vmem>>, vector<1x128xf32>
    %10 = vector.broadcast %9 : vector<1x128xf32> to vector<128x128xf32>
    %11 = arith.addf %8, %10 : vector<128x128xf32>
    %cst_8 = arith.constant 0.000000e+00 : f32
    %12 = vector.broadcast %cst_8 : f32 to vector<128x128xf32>
    %13 = arith.maximumf %11, %12 : vector<128x128xf32>
    %14 = vector.shape_cast %13 : vector<128x128xf32> to vector<16x8x128xf32>
    %cst_9 = arith.constant 0.000000e+00 : f32
    %15 = vector.broadcast %cst_9 : f32 to vector<16x1x128xf32>
    %16 = vector.extract_strided_slice %14 {offsets = [0, 0, 0], sizes = [16, 7, 128], strides = [1, 1, 1]} : vector<16x8x128xf32> to vector<16x7x128xf32>
    %17 = tpu.concatenate %15, %16 in 1 : vector<16x1x128xf32>, vector<16x7x128xf32> -> vector<16x8x128xf32>
    %18 = vector.extract_strided_slice %14 {offsets = [0, 1, 0], sizes = [16, 7, 128], strides = [1, 1, 1]} : vector<16x8x128xf32> to vector<16x7x128xf32>
    %19 = tpu.concatenate %18, %15 in 1 : vector<16x7x128xf32>, vector<16x1x128xf32> -> vector<16x8x128xf32>
    %20 = tpu.concatenate %17, %14, %19 in 2 : vector<16x8x128xf32>, vector<16x8x128xf32>, vector<16x8x128xf32> -> vector<16x8x384xf32>
    %21 = vector.shape_cast %20 : vector<16x8x384xf32> to vector<128x384xf32>
    %22 = arith.truncf %21 : vector<128x384xf32> to vector<128x384xbf16>
    %c0_10 = arith.constant 0 : index
    %c0_11 = arith.constant 0 : index
    %23 = vector.load %arg4[%c0_10, %c0_11] : memref<384x128xbf16, #tpu.memory_space<vmem>>, vector<384x128xbf16>
    %cst_12 = arith.constant dense<0.000000e+00> : vector<128x128xf32>
    %24 = tpu.matmul %22, %23, %cst_12 {dimension_numbers = #tpu.dot_dimension_numbers<[1], [0], [0], [1], [0, 0, 1, 1], [], []>} : vector<128x384xbf16>, vector<384x128xbf16>, vector<128x128xf32> -> vector<128x128xf32>
    %c0_13 = arith.constant 0 : index
    %c0_14 = arith.constant 0 : index
    %25 = vector.load %arg5[%c0_13, %c0_14] : memref<1x128xf32, #tpu.memory_space<vmem>>, vector<1x128xf32>
    %26 = vector.broadcast %25 : vector<1x128xf32> to vector<128x128xf32>
    %27 = arith.addf %24, %26 : vector<128x128xf32>
    %cst_15 = arith.constant 0.000000e+00 : f32
    %28 = vector.broadcast %cst_15 : f32 to vector<128x128xf32>
    %29 = arith.maximumf %27, %28 : vector<128x128xf32>
    %30 = vector.shape_cast %29 : vector<128x128xf32> to vector<16x8x128xf32>
    %cst_16 = arith.constant 0.000000e+00 : f32
    %31 = vector.broadcast %cst_16 : f32 to vector<16x1x128xf32>
    %32 = vector.extract_strided_slice %30 {offsets = [0, 0, 0], sizes = [16, 7, 128], strides = [1, 1, 1]} : vector<16x8x128xf32> to vector<16x7x128xf32>
    %33 = tpu.concatenate %31, %32 in 1 : vector<16x1x128xf32>, vector<16x7x128xf32> -> vector<16x8x128xf32>
    %34 = vector.extract_strided_slice %30 {offsets = [0, 1, 0], sizes = [16, 7, 128], strides = [1, 1, 1]} : vector<16x8x128xf32> to vector<16x7x128xf32>
    %35 = tpu.concatenate %34, %31 in 1 : vector<16x7x128xf32>, vector<16x1x128xf32> -> vector<16x8x128xf32>
    %36 = tpu.concatenate %33, %30, %35 in 2 : vector<16x8x128xf32>, vector<16x8x128xf32>, vector<16x8x128xf32> -> vector<16x8x384xf32>
    %37 = vector.shape_cast %36 : vector<16x8x384xf32> to vector<128x384xf32>
    %38 = arith.truncf %37 : vector<128x384xf32> to vector<128x384xbf16>
    %c0_17 = arith.constant 0 : index
    %c0_18 = arith.constant 0 : index
    %39 = vector.load %arg6[%c0_17, %c0_18] : memref<384x128xbf16, #tpu.memory_space<vmem>>, vector<384x128xbf16>
    %cst_19 = arith.constant dense<0.000000e+00> : vector<128x128xf32>
    %40 = tpu.matmul %38, %39, %cst_19 {dimension_numbers = #tpu.dot_dimension_numbers<[1], [0], [0], [1], [0, 0, 1, 1], [], []>} : vector<128x384xbf16>, vector<384x128xbf16>, vector<128x128xf32> -> vector<128x128xf32>
    %c0_20 = arith.constant 0 : index
    %c0_21 = arith.constant 0 : index
    %41 = vector.load %arg7[%c0_20, %c0_21] : memref<1x128xf32, #tpu.memory_space<vmem>>, vector<1x128xf32>
    %42 = vector.broadcast %41 : vector<1x128xf32> to vector<128x128xf32>
    %43 = arith.addf %40, %42 : vector<128x128xf32>
    %cst_22 = arith.constant 0.000000e+00 : f32
    %44 = vector.broadcast %cst_22 : f32 to vector<128x128xf32>
    %45 = arith.maximumf %43, %44 : vector<128x128xf32>
    %46 = arith.truncf %45 : vector<128x128xf32> to vector<128x128xbf16>
    %c0_23 = arith.constant 0 : index
    %c0_24 = arith.constant 0 : index
    %47 = vector.load %arg8[%c0_23, %c0_24] : memref<128x512xbf16, #tpu.memory_space<vmem>>, vector<128x512xbf16>
    %cst_25 = arith.constant dense<0.000000e+00> : vector<128x512xf32>
    %48 = tpu.matmul %46, %47, %cst_25 {dimension_numbers = #tpu.dot_dimension_numbers<[1], [0], [0], [1], [0, 0, 1, 1], [], []>} : vector<128x128xbf16>, vector<128x512xbf16>, vector<128x512xf32> -> vector<128x512xf32>
    %c0_26 = arith.constant 0 : index
    %c0_27 = arith.constant 0 : index
    %49 = vector.load %arg9[%c0_26, %c0_27] : memref<1x512xf32, #tpu.memory_space<vmem>>, vector<1x512xf32>
    %50 = vector.broadcast %49 : vector<1x512xf32> to vector<128x512xf32>
    %51 = arith.addf %48, %50 : vector<128x512xf32>
    %cst_28 = arith.constant 2.000000e-01 : f32
    %52 = vector.broadcast %cst_28 : f32 to vector<128x512xf32>
    %53 = arith.mulf %52, %51 : vector<128x512xf32>
    %54 = arith.addf %53, %1 : vector<128x512xf32>
    %55 = vector.shape_cast %54 : vector<128x512xf32> to vector<16x8x512xf32>
    %c0_29 = arith.constant 0 : index
    %c0_30 = arith.constant 0 : index
    %c0_31 = arith.constant 0 : index
    %56 = vector.load %arg10[%c0_29, %c0_30, %c0_31] : memref<16x8x512xf32, #tpu.memory_space<vmem>>, vector<16x8x512xf32>
    tpu.vector_store %arg10[%c0_29, %c0_30, %c0_31], %55 {strides = array<i32>} : memref<16x8x512xf32, #tpu.memory_space<vmem>>, vector<16x8x512xf32>,
    return
  }
  func.func @transform_0(%arg0: i32) -> (i32, i32, i32) {
    %c0_i32 = arith.constant 0 : i32
    %c0_i32_0 = arith.constant 0 : i32
    %c0_i32_1 = arith.constant 0 : i32
    return %arg0, %c0_i32, %c0_i32_0 : i32, i32, i32
  }
  func.func @transform_1(%arg0: i32) -> (i32, i32) {
    %c0_i32 = arith.constant 0 : i32
    %c0_i32_0 = arith.constant 0 : i32
    %c0_i32_1 = arith.constant 0 : i32
    return %c0_i32, %c0_i32_0 : i32, i32
  }
  func.func @transform_2(%arg0: i32) -> (i32, i32) {
    %c0_i32 = arith.constant 0 : i32
    %c0_i32_0 = arith.constant 0 : i32
    %c0_i32_1 = arith.constant 0 : i32
    return %c0_i32, %c0_i32_0 : i32, i32
  }
  func.func @transform_3(%arg0: i32) -> (i32, i32) {
    %c0_i32 = arith.constant 0 : i32
    %c0_i32_0 = arith.constant 0 : i32
    %c0_i32_1 = arith.constant 0 : i32
    return %c0_i32, %c0_i32_0 : i32, i32
  }
  func.func @transform_4(%arg0: i32) -> (i32, i32) {
    %c0_i32 = arith.constant 0 : i32
    %c0_i32_0 = arith.constant 0 : i32
    %c0_i32_1 = arith.constant 0 : i32
    return %c0_i32, %c0_i32_0 : i32, i32
  }
  func.func @transform_5(%arg0: i32) -> (i32, i32) {
    %c0_i32 = arith.constant 0 : i32
    %c0_i32_0 = arith.constant 0 : i32
    %c0_i32_1 = arith.constant 0 : i32
    return %c0_i32, %c0_i32_0 : i32, i32
  }
  func.func @transform_6(%arg0: i32) -> (i32, i32) {
    %c0_i32 = arith.constant 0 : i32
    %c0_i32_0 = arith.constant 0 : i32
    %c0_i32_1 = arith.constant 0 : i32
    return %c0_i32, %c0_i32_0 : i32, i32
  }
  func.func @transform_7(%arg0: i32) -> (i32, i32) {
    %c0_i32 = arith.constant 0 : i32
    %c0_i32_0 = arith.constant 0 : i32
    %c0_i32_1 = arith.constant 0 : i32
    return %c0_i32, %c0_i32_0 : i32, i32
  }
  func.func @transform_8(%arg0: i32) -> (i32, i32) {
    %c0_i32 = arith.constant 0 : i32
    %c0_i32_0 = arith.constant 0 : i32
    %c0_i32_1 = arith.constant 0 : i32
    return %c0_i32, %c0_i32_0 : i32, i32
  }
  func.func @transform_9(%arg0: i32) -> (i32, i32, i32) {
    %c0_i32 = arith.constant 0 : i32
    %c0_i32_0 = arith.constant 0 : i32
    %c0_i32_1 = arith.constant 0 : i32
    return %arg0, %c0_i32, %c0_i32_0 : i32, i32, i32
  }
}

</mosaic_0001>

<llo_original>
// kernel: tpu_custom_call.1
$region0: #{tpu_custom_call.1}
  #allocation0 [shape = 'u32[]', space=smem, size = 0x4, offset = 0x4, fixed_abs, tag = 'smem constant byte address 0x4 - core index']
  #allocation1 [shape = 'u32[144,128]{1,0:T(1,128)}', space=vmem, size = 0x12000, scoped, tag = 'internal scratch']
  %s0 = inlined_call_operand.hbm [shape: f32[32,8,512], index: 0, kind: input, shape index: {}]
  %s1 = inlined_call_operand.hbm [shape: bf16[512,128], index: 1, kind: input, shape index: {}]
  %s2 = inlined_call_operand.vmem [shape: f32[1,128], index: 2, kind: input, shape index: {}]
  %s3 = inlined_call_operand.hbm [shape: bf16[384,128], index: 3, kind: input, shape index: {}]
  %s4 = inlined_call_operand.vmem [shape: f32[1,128], index: 4, kind: input, shape index: {}]
  %s5 = inlined_call_operand.hbm [shape: bf16[384,128], index: 5, kind: input, shape index: {}]
  %s6 = inlined_call_operand.vmem [shape: f32[1,128], index: 6, kind: input, shape index: {}]
  %s7 = inlined_call_operand.hbm [shape: bf16[128,512], index: 7, kind: input, shape index: {}]
  %s8 = inlined_call_operand.vmem [shape: f32[1,512], index: 8, kind: input, shape index: {}]
  %s9 = inlined_call_operand.hbm [shape: f32[32,8,512], index: 9, kind: output, shape index: {}]
  %s10 = sld [smem:[#allocation0]]
  $region89: #{tpu_custom_call.1} parent=0
    _
  %s12 = ssub.s32 1, %s10
  %s13 = scalar_select 0, %s12, %s10
  $region1: #{tpu_custom_call.1} parent=0
    #allocation2 [shape = 'u8[524288]{0}', space=vmem, size = 0x80000, scoped, tag = 'input window, operand 0']
    #allocation3 [shape = 's32[2]{0}', space=sflag, size = 0x8, scoped, tag = 'scoped memory for tpu_custom_call.1']
    #allocation4 [shape = 's32[2]{0}', space=sflag, size = 0x8, scoped, tag = 'scoped memory for tpu_custom_call.1']
    #allocation5 [shape = 'u8[131072]{0}', space=vmem, size = 0x20000, scoped, tag = 'input window, operand 1, single buffered']
    #allocation6 [shape = 's32[1]{0}', space=sflag, size = 0x4, scoped, tag = 'scoped memory for tpu_custom_call.1']
    #allocation7 [shape = 'u8[98304]{0}', space=vmem, size = 0x18000, scoped, tag = 'input window, operand 3, single buffered']
    #allocation8 [shape = 'u8[98304]{0}', space=vmem, size = 0x18000, scoped, tag = 'input window, operand 5, single buffered']
    #allocation9 [shape = 's32[1]{0}', space=sflag, size = 0x4, scoped, tag = 'scoped memory for tpu_custom_call.1']
    #allocation10 [shape = 'u8[131072]{0}', space=vmem, size = 0x20000, scoped, tag = 'input window, operand 7, single buffered']
    #allocation11 [shape = 'u8[524288]{0}', space=vmem, size = 0x80000, scoped, tag = 'output window, operand 0']
    %14 = vsyncpa [#allocation3], 0
    %s15 = scalar_lea.sflag [#allocation3], 1
    %16 = vsyncpa %s15, 0
    %17 = vsyncpa [#allocation6], 0
    %18 = vsyncpa [#allocation9], 0
    %19 = vsyncpa [#allocation4], 0
    %s20 = scalar_lea.sflag [#allocation4], 1
    %21 = vsyncpa %s20, 0
    loop: start=0, step=1, limit=4
    $region2: #{tpu_custom_call.1} parent=1 // loop_pre_header
      _
    $region3: #{tpu_custom_call.1} parent=1 // loop_header
      %s23 = sphi 0, %s27
      %p24 = scmp.ge.s32.totalorder %s23, 4
      %s33 = sphi 0, %s35
      %s36 = sphi 0, %s33
      %s37 = sphi 0, %s36
      %s53 = sphi 0, %s37
      %s57 = sphi 0, %s57
      %s59 = sphi 0, %s57
      %s60 = sphi 0, %s59
      %s74 = sphi 0, %s60
      %s78 = sphi 0, %s78
      %s80 = sphi 0, %s78
      %s81 = sphi 0, %s80
      %s95 = sphi 0, %s81
      %s99 = sphi 0, %s99
      %s101 = sphi 0, %s99
      %s102 = sphi 0, %s101
      %s116 = sphi 0, %s102
      %s120 = sphi 0, %s120
      %s122 = sphi 0, %s120
      %s123 = sphi 0, %s122
      %s137 = sphi 0, %s123
      %s141 = sphi 0, %s141
      %s143 = sphi 0, %s141
      %s144 = sphi 0, %s143
      %s158 = sphi 0, %s144
      %s162 = sphi 0, %s162
      %s164 = sphi 0, %s162
      %s165 = sphi 0, %s164
      %s179 = sphi 0, %s165
      %s183 = sphi 0, %s183
      %s185 = sphi 0, %s183
      %s186 = sphi 0, %s185
      %s200 = sphi 0, %s186
      %s204 = sphi 0, %s204
      %s206 = sphi 0, %s204
      %s207 = sphi 0, %s206
      %s221 = sphi 0, %s207
      %s227 = sphi 0, %s229
      %s230 = sphi 0, %s227
      %s231 = sphi 0, %s230
      %s247 = sphi 0, %s231
    $region4: #{tpu_custom_call.1} parent=1 // loop_header_branch
      %26 = sbr.rel (%p24) target = $region8
    $region5: #{tpu_custom_call.1} parent=1 // loop_body
      %s28 = ssub.s32 %s23, 1
      %s29 = ssub.s32 %s23, 2
      %s30 = sadd.s32 %s23, 1
      %s31 = ssub.s32 %s23, %s30
      %p32 = scmp.eq.s32.totalorder %s31, 0
      %s34 = sadd.s32 %s33, 1
      %s35 = scalar_select %p32, %s33, %s34
      %p38 = pneg %p32
      %p39 = scmp.eq.s32.totalorder %s23, 1
      %p40 = por %p38, %p39
      %p41 = scmp.ne.s32.totalorder %s33, %s36
      %p42 = scmp.eq.s32.totalorder %s23, 0
      %p43 = por %p41, %p42
      %p44 = scmp.ne.s32.totalorder %s33, %s36
      %p45 = scmp.eq.s32.totalorder %s28, 1
      %p46 = por %p44, %p45
      %p47 = scmp.ne.s32.totalorder %s36, %s37
      %p48 = scmp.eq.s32.totalorder %s28, 0
      %p49 = por %p47, %p48
      %p50 = scmp.ne.s32.totalorder %s36, %s37
      %p51 = scmp.eq.s32.totalorder %s29, 1
      %p52 = por %p50, %p51
      %p54 = scmp.ne.s32.totalorder %s37, %s53
      %p55 = scmp.eq.s32.totalorder %s29, 0
      %p56 = por %p54, %p55
      %s58 = sadd.s32 %s57, 1
      %p61 = scmp.eq.s32.totalorder %s23, 1
      %p62 = scmp.ne.s32.totalorder %s57, %s59
      %p63 = scmp.eq.s32.totalorder %s23, 0
      %p64 = por %p62, %p63
      %p65 = scmp.ne.s32.totalorder %s57, %s59
      %p66 = scmp.eq.s32.totalorder %s28, 1
      %p67 = por %p65, %p66
      %p68 = scmp.ne.s32.totalorder %s59, %s60
      %p69 = scmp.eq.s32.totalorder %s28, 0
      %p70 = por %p68, %p69
      %p71 = scmp.ne.s32.totalorder %s59, %s60
      %p72 = scmp.eq.s32.totalorder %s29, 1
      %p73 = por %p71, %p72
      %p75 = scmp.ne.s32.totalorder %s60, %s74
      %p76 = scmp.eq.s32.totalorder %s29, 0
      %p77 = por %p75, %p76
      %s79 = sadd.s32 %s78, 1
      %p82 = scmp.eq.s32.totalorder %s23, 1
      %p83 = scmp.ne.s32.totalorder %s78, %s80
      %p84 = scmp.eq.s32.totalorder %s23, 0
      %p85 = por %p83, %p84
      %p86 = scmp.ne.s32.totalorder %s78, %s80
      %p87 = scmp.eq.s32.totalorder %s28, 1
      %p88 = por %p86, %p87
      %p89 = scmp.ne.s32.totalorder %s80, %s81
      %p90 = scmp.eq.s32.totalorder %s28, 0
      %p91 = por %p89, %p90
      %p92 = scmp.ne.s32.totalorder %s80, %s81
      %p93 = scmp.eq.s32.totalorder %s29, 1
      %p94 = por %p92, %p93
      %p96 = scmp.ne.s32.totalorder %s81, %s95
      %p97 = scmp.eq.s32.totalorder %s29, 0
      %p98 = por %p96, %p97
      %s100 = sadd.s32 %s99, 1
      %p103 = scmp.eq.s32.totalorder %s23, 1
      %p104 = scmp.ne.s32.totalorder %s99, %s101
      %p105 = scmp.eq.s32.totalorder %s23, 0
      %p106 = por %p104, %p105
      %p107 = scmp.ne.s32.totalorder %s99, %s101
      %p108 = scmp.eq.s32.totalorder %s28, 1
      %p109 = por %p107, %p108
      %p110 = scmp.ne.s32.totalorder %s101, %s102
      %p111 = scmp.eq.s32.totalorder %s28, 0
      %p112 = por %p110, %p111
      %p113 = scmp.ne.s32.totalorder %s101, %s102
      %p114 = scmp.eq.s32.totalorder %s29, 1
      %p115 = por %p113, %p114
      %p117 = scmp.ne.s32.totalorder %s102, %s116
      %p118 = scmp.eq.s32.totalorder %s29, 0
      %p119 = por %p117, %p118
      %s121 = sadd.s32 %s120, 1
      %p124 = scmp.eq.s32.totalorder %s23, 1
      %p125 = scmp.ne.s32.totalorder %s120, %s122
      %p126 = scmp.eq.s32.totalorder %s23, 0
      %p127 = por %p125, %p126
      %p128 = scmp.ne.s32.totalorder %s120, %s122
      %p129 = scmp.eq.s32.totalorder %s28, 1
      %p130 = por %p128, %p129
      %p131 = scmp.ne.s32.totalorder %s122, %s123
      %p132 = scmp.eq.s32.totalorder %s28, 0
      %p133 = por %p131, %p132
      %p134 = scmp.ne.s32.totalorder %s122, %s123
      %p135 = scmp.eq.s32.totalorder %s29, 1
      %p136 = por %p134, %p135
      %p138 = scmp.ne.s32.totalorder %s123, %s137
      %p139 = scmp.eq.s32.totalorder %s29, 0
      %p140 = por %p138, %p139
      %s142 = sadd.s32 %s141, 1
      %p145 = scmp.eq.s32.totalorder %s23, 1
      %p146 = scmp.ne.s32.totalorder %s141, %s143
      %p147 = scmp.eq.s32.totalorder %s23, 0
      %p148 = por %p146, %p147
      %p149 = scmp.ne.s32.totalorder %s141, %s143
      %p150 = scmp.eq.s32.totalorder %s28, 1
      %p151 = por %p149, %p150
      %p152 = scmp.ne.s32.totalorder %s143, %s144
      %p153 = scmp.eq.s32.totalorder %s28, 0
      %p154 = por %p152, %p153
      %p155 = scmp.ne.s32.totalorder %s143, %s144
      %p156 = scmp.eq.s32.totalorder %s29, 1
      %p157 = por %p155, %p156
      %p159 = scmp.ne.s32.totalorder %s144, %s158
      %p160 = scmp.eq.s32.totalorder %s29, 0
      %p161 = por %p159, %p160
      %s163 = sadd.s32 %s162, 1
      %p166 = scmp.eq.s32.totalorder %s23, 1
      %p167 = scmp.ne.s32.totalorder %s162, %s164
      %p168 = scmp.eq.s32.totalorder %s23, 0
      %p169 = por %p167, %p168
      %p170 = scmp.ne.s32.totalorder %s162, %s164
      %p171 = scmp.eq.s32.totalorder %s28, 1
      %p172 = por %p170, %p171
      %p173 = scmp.ne.s32.totalorder %s164, %s165
      %p174 = scmp.eq.s32.totalorder %s28, 0
      %p175 = por %p173, %p174
      %p176 = scmp.ne.s32.totalorder %s164, %s165
      %p177 = scmp.eq.s32.totalorder %s29, 1
      %p178 = por %p176, %p177
      %p180 = scmp.ne.s32.totalorder %s165, %s179
      %p181 = scmp.eq.s32.totalorder %s29, 0
      %p182 = por %p180, %p181
      %s184 = sadd.s32 %s183, 1
      %p187 = scmp.eq.s32.totalorder %s23, 1
      %p188 = scmp.ne.s32.totalorder %s183, %s185
      %p189 = scmp.eq.s32.totalorder %s23, 0
      %p190 = por %p188, %p189
      %p191 = scmp.ne.s32.totalorder %s183, %s185
      %p192 = scmp.eq.s32.totalorder %s28, 1
      %p193 = por %p191, %p192
      %p194 = scmp.ne.s32.totalorder %s185, %s186
      %p195 = scmp.eq.s32.totalorder %s28, 0
      %p196 = por %p194, %p195
      %p197 = scmp.ne.s32.totalorder %s185, %s186
      %p198 = scmp.eq.s32.totalorder %s29, 1
      %p199 = por %p197, %p198
      %p201 = scmp.ne.s32.totalorder %s186, %s200
      %p202 = scmp.eq.s32.totalorder %s29, 0
      %p203 = por %p201, %p202
      %s205 = sadd.s32 %s204, 1
      %p208 = scmp.eq.s32.totalorder %s23, 1
      %p209 = scmp.ne.s32.totalorder %s204, %s206
      %p210 = scmp.eq.s32.totalorder %s23, 0
      %p211 = por %p209, %p210
      %p212 = scmp.ne.s32.totalorder %s204, %s206
      %p213 = scmp.eq.s32.totalorder %s28, 1
      %p214 = por %p212, %p213
      %p215 = scmp.ne.s32.totalorder %s206, %s207
      %p216 = scmp.eq.s32.totalorder %s28, 0
      %p217 = por %p215, %p216
      %p218 = scmp.ne.s32.totalorder %s206, %s207
      %p219 = scmp.eq.s32.totalorder %s29, 1
      %p220 = por %p218, %p219
      %p222 = scmp.ne.s32.totalorder %s207, %s221
      %p223 = scmp.eq.s32.totalorder %s29, 0
      %p224 = por %p222, %p223
      %s225 = ssub.s32 %s23, %s30
      %p226 = scmp.eq.s32.totalorder %s225, 0
      %s228 = sadd.s32 %s227, 1
      %s229 = scalar_select %p226, %s227, %s228
      %p232 = pneg %p226
      %p233 = scmp.eq.s32.totalorder %s23, 1
      %p234 = por %p232, %p233
      %p235 = scmp.ne.s32.totalorder %s227, %s230
      %p236 = scmp.eq.s32.totalorder %s23, 0
      %p237 = por %p235, %p236
      %p238 = scmp.ne.s32.totalorder %s227, %s230
      %p239 = scmp.eq.s32.totalorder %s28, 1
      %p240 = por %p238, %p239
      %p241 = scmp.ne.s32.totalorder %s230, %s231
      %p242 = scmp.eq.s32.totalorder %s28, 0
      %p243 = por %p241, %p242
      %p244 = scmp.ne.s32.totalorder %s230, %s231
      %p245 = scmp.eq.s32.totalorder %s29, 1
      %p246 = por %p244, %p245
      %p248 = scmp.ne.s32.totalorder %s231, %s247
      %p249 = scmp.eq.s32.totalorder %s29, 0
      %p250 = por %p248, %p249
      %p251 = scmp.le.s32.totalorder 1, %s23
      %p252 = scmp.lt.s32.totalorder %s23, 3
      %p253 = pnand %p251, %p252
      %p254 = pneg %p253
      // Predicated region
      $region9: #{tpu_custom_call.1} parent=5 // pred_check
        _
      $region10: #{tpu_custom_call.1} parent=5 // pred_check_branch
        %256 = sbr.rel (%p253) target = $region12
      $region11: #{tpu_custom_call.1} parent=5 // pred_region
        %s257 = ssub.s32 %s23, 1
        // Predicated region
        $region13: #{tpu_custom_call.1} parent=11 // pred_check
          %p258 = pneg %p70
        $region14: #{tpu_custom_call.1} parent=11 // pred_check_branch
          %260 = sbr.rel (%p258) target = $region16
        $region15: #{tpu_custom_call.1} parent=11 // pred_region
          %s262 = ssub.s32 4096, 4096
          %263 = vsyncadd [#allocation6], %s262
          %s264 = sshll.u32 [#allocation5], 4
          %s265 = int_to_ptr.vmem [resolvable:$true] %s264
          %270 = dma.hbm_to_vmem [thread:$0]  %s1, 4096, %s265, [#allocation6], 64, 64, 4
        $region16: #{tpu_custom_call.1} parent=11 // pred_fallthru
          _
        // Predicated region
        $region17: #{tpu_custom_call.1} parent=11 // pred_check
          %p271 = pneg %p91
        $region18: #{tpu_custom_call.1} parent=11 // pred_check_branch
          %273 = sbr.rel (%p271) target = $region20
        $region19: #{tpu_custom_call.1} parent=11 // pred_region
          _
        $region20: #{tpu_custom_call.1} parent=11 // pred_fallthru
          _
        // Predicated region
        $region21: #{tpu_custom_call.1} parent=11 // pred_check
          %p274 = pneg %p112
        $region22: #{tpu_custom_call.1} parent=11 // pred_check_branch
          %276 = sbr.rel (%p274) target = $region24
        $region23: #{tpu_custom_call.1} parent=11 // pred_region
          %s278 = ssub.s32 3072, 3072
          %279 = vsyncadd [#allocation6], %s278
          %s280 = sshll.u32 [#allocation7], 4
          %s281 = int_to_ptr.vmem [resolvable:$true] %s280
          %286 = dma.hbm_to_vmem [thread:$0]  %s3, 3072, %s281, [#allocation6], 64, 64, 4
        $region24: #{tpu_custom_call.1} parent=11 // pred_fallthru
          _
        // Predicated region
        $region25: #{tpu_custom_call.1} parent=11 // pred_check
          %p287 = pneg %p133
        $region26: #{tpu_custom_call.1} parent=11 // pred_check_branch
          %289 = sbr.rel (%p287) target = $region28
        $region27: #{tpu_custom_call.1} parent=11 // pred_region
          _
        $region28: #{tpu_custom_call.1} parent=11 // pred_fallthru
          _
        // Predicated region
        $region29: #{tpu_custom_call.1} parent=11 // pred_check
          %p290 = pneg %p154
        $region30: #{tpu_custom_call.1} parent=11 // pred_check_branch
          %292 = sbr.rel (%p290) target = $region32
        $region31: #{tpu_custom_call.1} parent=11 // pred_region
          %s294 = ssub.s32 3072, 3072
          %295 = vsyncadd [#allocation9], %s294
          %s296 = sshll.u32 [#allocation8], 4
          %s297 = int_to_ptr.vmem [resolvable:$true] %s296
          %302 = dma.hbm_to_vmem [thread:$0]  %s5, 3072, %s297, [#allocation9], 64, 64, 4
        $region32: #{tpu_custom_call.1} parent=11 // pred_fallthru
          _
        // Predicated region
        $region33: #{tpu_custom_call.1} parent=11 // pred_check
          %p303 = pneg %p175
        $region34: #{tpu_custom_call.1} parent=11 // pred_check_branch
          %305 = sbr.rel (%p303) target = $region36
        $region35: #{tpu_custom_call.1} parent=11 // pred_region
          _
        $region36: #{tpu_custom_call.1} parent=11 // pred_fallthru
          _
        // Predicated region
        $region37: #{tpu_custom_call.1} parent=11 // pred_check
          %p306 = pneg %p196
        $region38: #{tpu_custom_call.1} parent=11 // pred_check_branch
          %308 = sbr.rel (%p306) target = $region40
        $region39: #{tpu_custom_call.1} parent=11 // pred_region
          %s310 = ssub.s32 4096, 4096
          %311 = vsyncadd [#allocation9], %s310
          %s312 = sshll.u32 [#allocation10], 4
          %s313 = int_to_ptr.vmem [resolvable:$true] %s312
          %318 = dma.hbm_to_vmem [thread:$0]  %s7, 4096, %s313, [#allocation9], 256, 256, 16
        $region40: #{tpu_custom_call.1} parent=11 // pred_fallthru
          _
        // Predicated region
        $region41: #{tpu_custom_call.1} parent=11 // pred_check
          %p319 = pneg %p217
        $region42: #{tpu_custom_call.1} parent=11 // pred_check_branch
          %321 = sbr.rel (%p319) target = $region44
        $region43: #{tpu_custom_call.1} parent=11 // pred_region
          _
        $region44: #{tpu_custom_call.1} parent=11 // pred_fallthru
          _
      $region12: #{tpu_custom_call.1} parent=5 // pred_fallthru
        _
      %p322 = scmp.lt.s32.totalorder %s23, 2
      // Predicated region
      $region45: #{tpu_custom_call.1} parent=5 // pred_check
        %p323 = pneg %p322
      $region46: #{tpu_custom_call.1} parent=5 // pred_check_branch
        %325 = sbr.rel (%p323) target = $region48
      $region47: #{tpu_custom_call.1} parent=5 // pred_region
        // Predicated region
        $region49: #{tpu_custom_call.1} parent=47 // pred_check
          %p326 = pneg %p43
        $region50: #{tpu_custom_call.1} parent=47 // pred_check_branch
          %328 = sbr.rel (%p326) target = $region52
        $region51: #{tpu_custom_call.1} parent=47 // pred_region
          %s329 = sand.u32 %s33, 1
          %s330 = scalar_lea.sflag [#allocation3], %s329
          %s331 = sand.u32 %s33, 1
          %s332 = smul.addr %s331, 512
          %s333 = scalar_lea.vmem [#allocation2], %s332
          %s334 = smul.u32 16, %s23
          %s336 = ssub.s32 8192, 8192
          %337 = vsyncadd %s330, %s336
          %s338 = smul.addr %s334, 4
          %s339 = smul.addr %s338, 128
          %s340 = scalar_lea.hbm %s0, %s339
          %s341 = sshll.u32 %s333, 4
          %s342 = int_to_ptr.vmem [resolvable:$true] %s341
          %347 = dma.hbm_to_vmem [thread:$0]  %s340, 8192, %s342, %s330, 512, 512, 32
        $region52: #{tpu_custom_call.1} parent=47 // pred_fallthru
          _
      $region48: #{tpu_custom_call.1} parent=5 // pred_fallthru
        _
      %p348 = scmp.le.s32.totalorder 1, %s23
      %p349 = scmp.lt.s32.totalorder %s23, 3
      %p350 = pnand %p348, %p349
      %p351 = pneg %p350
      // Predicated region
      $region53: #{tpu_custom_call.1} parent=5 // pred_check
        _
      $region54: #{tpu_custom_call.1} parent=5 // pred_check_branch
        %353 = sbr.rel (%p350) target = $region56
      $region55: #{tpu_custom_call.1} parent=5 // pred_region
        %s354 = ssub.s32 %s23, 1
        %s355 = sand.u32 %s36, 1
        %s356 = scalar_lea.sflag [#allocation3], %s355
        %s357 = sand.u32 %s36, 1
        %s358 = smul.addr %s357, 512
        %s359 = scalar_lea.vmem [#allocation2], %s358
        // Predicated region
        $region57: #{tpu_custom_call.1} parent=55 // pred_check
          %p360 = pneg %p49
        $region58: #{tpu_custom_call.1} parent=55 // pred_check_branch
          %362 = sbr.rel (%p360) target = $region60
        $region59: #{tpu_custom_call.1} parent=55 // pred_region
          %363 = dma.done %s356, 8192
        $region60: #{tpu_custom_call.1} parent=55 // pred_fallthru
          _
        // Predicated region
        $region61: #{tpu_custom_call.1} parent=55 // pred_check
          %p364 = pneg %p70
        $region62: #{tpu_custom_call.1} parent=55 // pred_check_branch
          %366 = sbr.rel (%p364) target = $region64
        $region63: #{tpu_custom_call.1} parent=55 // pred_region
          %367 = dma.done [#allocation6], 4096
        $region64: #{tpu_custom_call.1} parent=55 // pred_fallthru
          _
        // Predicated region
        $region65: #{tpu_custom_call.1} parent=55 // pred_check
          %p368 = pneg %p112
        $region66: #{tpu_custom_call.1} parent=55 // pred_check_branch
          %370 = sbr.rel (%p368) target = $region68
        $region67: #{tpu_custom_call.1} parent=55 // pred_region
          %371 = dma.done [#allocation6], 3072
        $region68: #{tpu_custom_call.1} parent=55 // pred_fallthru
          _
        // Predicated region
        $region69: #{tpu_custom_call.1} parent=55 // pred_check
          %p372 = pneg %p154
        $region70: #{tpu_custom_call.1} parent=55 // pred_check_branch
          %374 = sbr.rel (%p372) target = $region72
        $region71: #{tpu_custom_call.1} parent=55 // pred_region
          %375 = dma.done [#allocation9], 3072
        $region72: #{tpu_custom_call.1} parent=55 // pred_fallthru
          _
        // Predicated region
        $region73: #{tpu_custom_call.1} parent=55 // pred_check
          %p376 = pneg %p196
        $region74: #{tpu_custom_call.1} parent=55 // pred_check_branch
          %378 = sbr.rel (%p376) target = $region76
        $region75: #{tpu_custom_call.1} parent=55 // pred_region
          %379 = dma.done [#allocation9], 4096
        $region76: #{tpu_custom_call.1} parent=55 // pred_fallthru
          _
        %s380 = sand.u32 %s36, 1
        %s381 = scalar_lea.sflag [#allocation3], %s380
        %s382 = sand.u32 %s36, 1
        %s383 = smul.addr %s382, 512
        %s384 = scalar_lea.vmem [#allocation2], %s383
        %p385 = pneg %p49
        %p386 = pneg %p46
        %p387 = pneg %p70
        %p388 = pneg %p67
        %p389 = pneg %p91
        %p390 = pneg %p88
        %p391 = pneg %p112
        %p392 = pneg %p109
        %p393 = pneg %p133
        %p394 = pneg %p130
        %p395 = pneg %p154
        %p396 = pneg %p151
        %p397 = pneg %p175
        %p398 = pneg %p172
        %p399 = pneg %p196
        %p400 = pneg %p193
        %p401 = pneg %p217
        %p402 = pneg %p214
        %p403 = pneg %p243
        %p404 = pneg %p240
        %s405 = sand.u32 %s230, 1
        %s406 = scalar_lea.sflag [#allocation4], %s405
        %s407 = sand.u32 %s230, 1
        %s408 = smul.addr %s407, 512
        %s409 = scalar_lea.vmem [#allocation11], %s408
        %s410 = smul.u32 16, %s28
        %s411 = smul.u32 16, %s28
        %v413 = vld [vmem:[%s359] sm:$0xff]
        %v414 = vld [vmem:[%s359 + $0x8] sm:$0xff]
        %v415 = vld [vmem:[%s359 + $0x10] sm:$0xff]
        %v416 = vld [vmem:[%s359 + $0x18] sm:$0xff]
        %v417 = vld [vmem:[%s359 + $0x20] sm:$0xff]
        %v418 = vld [vmem:[%s359 + $0x28] sm:$0xff]
        %v419 = vld [vmem:[%s359 + $0x30] sm:$0xff]
        %v420 = vld [vmem:[%s359 + $0x38] sm:$0xff]
        %v421 = vld [vmem:[%s359 + $0x40] sm:$0xff]
        %v422 = vld [vmem:[%s359 + $0x48] sm:$0xff]
        %v423 = vld [vmem:[%s359 + $0x50] sm:$0xff]
        %v424 = vld [vmem:[%s359 + $0x58] sm:$0xff]
        %v425 = vld [vmem:[%s359 + $0x60] sm:$0xff]
        %v426 = vld [vmem:[%s359 + $0x68] sm:$0xff]
        %v427 = vld [vmem:[%s359 + $0x70] sm:$0xff]
        %v428 = vld [vmem:[%s359 + $0x78] sm:$0xff]
        %v429 = vld [vmem:[%s359 + $0x80] sm:$0xff]
        %v430 = vld [vmem:[%s359 + $0x88] sm:$0xff]
        %v431 = vld [vmem:[%s359 + $0x90] sm:$0xff]
        %v432 = vld [vmem:[%s359 + $0x98] sm:$0xff]
        %v433 = vld [vmem:[%s359 + $0xa0] sm:$0xff]
        %v434 = vld [vmem:[%s359 + $0xa8] sm:$0xff]
        %v435 = vld [vmem:[%s359 + $0xb0] sm:$0xff]
        %v436 = vld [vmem:[%s359 + $0xb8] sm:$0xff]
        %v437 = vld [vmem:[%s359 + $0xc0] sm:$0xff]
        %v438 = vld [vmem:[%s359 + $0xc8] sm:$0xff]
        %v439 = vld [vmem:[%s359 + $0xd0] sm:$0xff]
        %v440 = vld [vmem:[%s359 + $0xd8] sm:$0xff]
        %v441 = vld [vmem:[%s359 + $0xe0] sm:$0xff]
        %v442 = vld [vmem:[%s359 + $0xe8] sm:$0xff]
        %v443 = vld [vmem:[%s359 + $0xf0] sm:$0xff]
        %v444 = vld [vmem:[%s359 + $0xf8] sm:$0xff]
        %v445 = vld [vmem:[%s359 + $0x100] sm:$0xff]
        %v446 = vld [vmem:[%s359 + $0x108] sm:$0xff]
        %v447 = vld [vmem:[%s359 + $0x110] sm:$0xff]
        %v448 = vld [vmem:[%s359 + $0x118] sm:$0xff]
        %v449 = vld [vmem:[%s359 + $0x120] sm:$0xff]
        %v450 = vld [vmem:[%s359 + $0x128] sm:$0xff]
        %v451 = vld [vmem:[%s359 + $0x130] sm:$0xff]
        %v452 = vld [vmem:[%s359 + $0x138] sm:$0xff]
        %v453 = vld [vmem:[%s359 + $0x140] sm:$0xff]
        %v454 = vld [vmem:[%s359 + $0x148] sm:$0xff]
        %v455 = vld [vmem:[%s359 + $0x150] sm:$0xff]
        %v456 = vld [vmem:[%s359 + $0x158] sm:$0xff]
        %v457 = vld [vmem:[%s359 + $0x160] sm:$0xff]
        %v458 = vld [vmem:[%s359 + $0x168] sm:$0xff]
        %v459 = vld [vmem:[%s359 + $0x170] sm:$0xff]
        %v460 = vld [vmem:[%s359 + $0x178] sm:$0xff]
        %v461 = vld [vmem:[%s359 + $0x180] sm:$0xff]
        %v462 = vld [vmem:[%s359 + $0x188] sm:$0xff]
        %v463 = vld [vmem:[%s359 + $0x190] sm:$0xff]
        %v464 = vld [vmem:[%s359 + $0x198] sm:$0xff]
        %v465 = vld [vmem:[%s359 + $0x1a0] sm:$0xff]
        %v466 = vld [vmem:[%s359 + $0x1a8] sm:$0xff]
        %v467 = vld [vmem:[%s359 + $0x1b0] sm:$0xff]
        %v468 = vld [vmem:[%s359 + $0x1b8] sm:$0xff]
        %v469 = vld [vmem:[%s359 + $0x1c0] sm:$0xff]
        %v470 = vld [vmem:[%s359 + $0x1c8] sm:$0xff]
        %v471 = vld [vmem:[%s359 + $0x1d0] sm:$0xff]
        %v472 = vld [vmem:[%s359 + $0x1d8] sm:$0xff]
        %v473 = vld [vmem:[%s359 + $0x1e0] sm:$0xff]
        %v474 = vld [vmem:[%s359 + $0x1e8] sm:$0xff]
        %v475 = vld [vmem:[%s359 + $0x1f0] sm:$0xff]
        %v476 = vld [vmem:[%s359 + $0x1f8] sm:$0xff]
        %v477 = vmul.f32 %v413, 1.25
        %v478 = vmul.f32 %v414, 1.25
        %v479 = vmul.f32 %v415, 1.25
        %v480 = vmul.f32 %v416, 1.25
        %v481 = vmul.f32 %v417, 1.25
        %v482 = vmul.f32 %v418, 1.25
        %v483 = vmul.f32 %v419, 1.25
        %v484 = vmul.f32 %v420, 1.25
        %v485 = vmul.f32 %v421, 1.25
        %v486 = vmul.f32 %v422, 1.25
        %v487 = vmul.f32 %v423, 1.25
        %v488 = vmul.f32 %v424, 1.25
        %v489 = vmul.f32 %v425, 1.25
        %v490 = vmul.f32 %v426, 1.25
        %v491 = vmul.f32 %v427, 1.25
        %v492 = vmul.f32 %v428, 1.25
        %v493 = vmul.f32 %v429, 1.25
        %v494 = vmul.f32 %v430, 1.25
        %v495 = vmul.f32 %v431, 1.25
        %v496 = vmul.f32 %v432, 1.25
        %v497 = vmul.f32 %v433, 1.25
        %v498 = vmul.f32 %v434, 1.25
        %v499 = vmul.f32 %v435, 1.25
        %v500 = vmul.f32 %v436, 1.25
        %v501 = vmul.f32 %v437, 1.25
        %v502 = vmul.f32 %v438, 1.25
        %v503 = vmul.f32 %v439, 1.25
        %v504 = vmul.f32 %v440, 1.25
        %v505 = vmul.f32 %v441, 1.25
        %v506 = vmul.f32 %v442, 1.25
        %v507 = vmul.f32 %v443, 1.25
        %v508 = vmul.f32 %v444, 1.25
        %v509 = vmul.f32 %v445, 1.25
        %v510 = vmul.f32 %v446, 1.25
        %v511 = vmul.f32 %v447, 1.25
        %v512 = vmul.f32 %v448, 1.25
        %v513 = vmul.f32 %v449, 1.25
        %v514 = vmul.f32 %v450, 1.25
        %v515 = vmul.f32 %v451, 1.25
        %v516 = vmul.f32 %v452, 1.25
        %v517 = vmul.f32 %v453, 1.25
        %v518 = vmul.f32 %v454, 1.25
        %v519 = vmul.f32 %v455, 1.25
        %v520 = vmul.f32 %v456, 1.25
        %v521 = vmul.f32 %v457, 1.25
        %v522 = vmul.f32 %v458, 1.25
        %v523 = vmul.f32 %v459, 1.25
        %v524 = vmul.f32 %v460, 1.25
        %v525 = vmul.f32 %v461, 1.25
        %v526 = vmul.f32 %v462, 1.25
        %v527 = vmul.f32 %v463, 1.25
        %v528 = vmul.f32 %v464, 1.25
        %v529 = vmul.f32 %v465, 1.25
        %v530 = vmul.f32 %v466, 1.25
        %v531 = vmul.f32 %v467, 1.25
        %v532 = vmul.f32 %v468, 1.25
        %v533 = vmul.f32 %v469, 1.25
        %v534 = vmul.f32 %v470, 1.25
        %v535 = vmul.f32 %v471, 1.25
        %v536 = vmul.f32 %v472, 1.25
        %v537 = vmul.f32 %v473, 1.25
        %v538 = vmul.f32 %v474, 1.25
        %v539 = vmul.f32 %v475, 1.25
        %v540 = vmul.f32 %v476, 1.25
        %v541 = vmax.f32 %v477, 0.0
        %v542 = vmax.f32 %v478, 0.0
        %v543 = vmax.f32 %v479, 0.0
        %v544 = vmax.f32 %v480, 0.0
        %v545 = vmax.f32 %v481, 0.0
        %v546 = vmax.f32 %v482, 0.0
        %v547 = vmax.f32 %v483, 0.0
        %v548 = vmax.f32 %v484, 0.0
        %v549 = vmax.f32 %v485, 0.0
        %v550 = vmax.f32 %v486, 0.0
        %v551 = vmax.f32 %v487, 0.0
        %v552 = vmax.f32 %v488, 0.0
        %v553 = vmax.f32 %v489, 0.0
        %v554 = vmax.f32 %v490, 0.0
        %v555 = vmax.f32 %v491, 0.0
        %v556 = vmax.f32 %v492, 0.0
        %v557 = vmax.f32 %v493, 0.0
        %v558 = vmax.f32 %v494, 0.0
        %v559 = vmax.f32 %v495, 0.0
        %v560 = vmax.f32 %v496, 0.0
        %v561 = vmax.f32 %v497, 0.0
        %v562 = vmax.f32 %v498, 0.0
        %v563 = vmax.f32 %v499, 0.0
        %v564 = vmax.f32 %v500, 0.0
        %v565 = vmax.f32 %v501, 0.0
        %v566 = vmax.f32 %v502, 0.0
        %v567 = vmax.f32 %v503, 0.0
        %v568 = vmax.f32 %v504, 0.0
        %v569 = vmax.f32 %v505, 0.0
        %v570 = vmax.f32 %v506, 0.0
        %v571 = vmax.f32 %v507, 0.0
        %v572 = vmax.f32 %v508, 0.0
        %v573 = vmax.f32 %v509, 0.0
        %v574 = vmax.f32 %v510, 0.0
        %v575 = vmax.f32 %v511, 0.0
        %v576 = vmax.f32 %v512, 0.0
        %v577 = vmax.f32 %v513, 0.0
        %v578 = vmax.f32 %v514, 0.0
        %v579 = vmax.f32 %v515, 0.0
        %v580 = vmax.f32 %v516, 0.0
        %v581 = vmax.f32 %v517, 0.0
        %v582 = vmax.f32 %v518, 0.0
        %v583 = vmax.f32 %v519, 0.0
        %v584 = vmax.f32 %v520, 0.0
        %v585 = vmax.f32 %v521, 0.0
        %v586 = vmax.f32 %v522, 0.0
        %v587 = vmax.f32 %v523, 0.0
        %v588 = vmax.f32 %v524, 0.0
        %v589 = vmax.f32 %v525, 0.0
        %v590 = vmax.f32 %v526, 0.0
        %v591 = vmax.f32 %v527, 0.0
        %v592 = vmax.f32 %v528, 0.0
        %v593 = vmax.f32 %v529, 0.0
        %v594 = vmax.f32 %v530, 0.0
        %v595 = vmax.f32 %v531, 0.0
        %v596 = vmax.f32 %v532, 0.0
        %v597 = vmax.f32 %v533, 0.0
        %v598 = vmax.f32 %v534, 0.0
        %v599 = vmax.f32 %v535, 0.0
        %v600 = vmax.f32 %v536, 0.0
        %v601 = vmax.f32 %v537, 0.0
        %v602 = vmax.f32 %v538, 0.0
        %v603 = vmax.f32 %v539, 0.0
        %v604 = vmax.f32 %v540, 0.0
        %v605 = vpack.c.bf16 %v545, %v541
        %v606 = vpack.c.bf16 %v546, %v542
        %v607 = vpack.c.bf16 %v547, %v543
        %v608 = vpack.c.bf16 %v548, %v544
        %v609 = vpack.c.bf16 %v553, %v549
        %v610 = vpack.c.bf16 %v554, %v550
        %v611 = vpack.c.bf16 %v555, %v551
        %v612 = vpack.c.bf16 %v556, %v552
        %v613 = vpack.c.bf16 %v561, %v557
        %v614 = vpack.c.bf16 %v562, %v558
        %v615 = vpack.c.bf16 %v563, %v559
        %v616 = vpack.c.bf16 %v564, %v560
        %v617 = vpack.c.bf16 %v569, %v565
        %v618 = vpack.c.bf16 %v570, %v566
        %v619 = vpack.c.bf16 %v571, %v567
        %v620 = vpack.c.bf16 %v572, %v568
        %v621 = vpack.c.bf16 %v577, %v573
        %v622 = vpack.c.bf16 %v578, %v574
        %v623 = vpack.c.bf16 %v579, %v575
        %v624 = vpack.c.bf16 %v580, %v576
        %v625 = vpack.c.bf16 %v585, %v581
        %v626 = vpack.c.bf16 %v586, %v582
        %v627 = vpack.c.bf16 %v587, %v583
        %v628 = vpack.c.bf16 %v588, %v584
        %v629 = vpack.c.bf16 %v593, %v589
        %v630 = vpack.c.bf16 %v594, %v590
        %v631 = vpack.c.bf16 %v595, %v591
        %v632 = vpack.c.bf16 %v596, %v592
        %v633 = vpack.c.bf16 %v601, %v597
        %v634 = vpack.c.bf16 %v602, %v598
        %v635 = vpack.c.bf16 %v603, %v599
        %v636 = vpack.c.bf16 %v604, %v600
        %v637 = vld [vmem:[#allocation5] sm:$0xf]
        %v638 = vld [vmem:[#allocation5 + $0x4] sm:$0xf]
        %v639 = vld [vmem:[#allocation5 + $0x8] sm:$0xf]
        %v640 = vld [vmem:[#allocation5 + $0xc] sm:$0xf]
        %v641 = vld [vmem:[#allocation5 + $0x10] sm:$0xf]
        %v642 = vld [vmem:[#allocation5 + $0x14] sm:$0xf]
        %v643 = vld [vmem:[#allocation5 + $0x18] sm:$0xf]
        %v644 = vld [vmem:[#allocation5 + $0x1c] sm:$0xf]
        %v645 = vld [vmem:[#allocation5 + $0x20] sm:$0xf]
        %v646 = vld [vmem:[#allocation5 + $0x24] sm:$0xf]
        %v647 = vld [vmem:[#allocation5 + $0x28] sm:$0xf]
        %v648 = vld [vmem:[#allocation5 + $0x2c] sm:$0xf]
        %v649 = vld [vmem:[#allocation5 + $0x30] sm:$0xf]
        %v650 = vld [vmem:[#allocation5 + $0x34] sm:$0xf]
        %v651 = vld [vmem:[#allocation5 + $0x38] sm:$0xf]
        %v652 = vld [vmem:[#allocation5 + $0x3c] sm:$0xf]
        %v653 = vld [vmem:[#allocation5 + $0x40] sm:$0xf]
        %v654 = vld [vmem:[#allocation5 + $0x44] sm:$0xf]
        %v655 = vld [vmem:[#allocation5 + $0x48] sm:$0xf]
        %v656 = vld [vmem:[#allocation5 + $0x4c] sm:$0xf]
        %v657 = vld [vmem:[#allocation5 + $0x50] sm:$0xf]
        %v658 = vld [vmem:[#allocation5 + $0x54] sm:$0xf]
        %v659 = vld [vmem:[#allocation5 + $0x58] sm:$0xf]
        %v660 = vld [vmem:[#allocation5 + $0x5c] sm:$0xf]
        %v661 = vld [vmem:[#allocation5 + $0x60] sm:$0xf]
        %v662 = vld [vmem:[#allocation5 + $0x64] sm:$0xf]
        %v663 = vld [vmem:[#allocation5 + $0x68] sm:$0xf]
        %v664 = vld [vmem:[#allocation5 + $0x6c] sm:$0xf]
        %v665 = vld [vmem:[#allocation5 + $0x70] sm:$0xf]
        %v666 = vld [vmem:[#allocation5 + $0x74] sm:$0xf]
        %v667 = vld [vmem:[#allocation5 + $0x78] sm:$0xf]
        %v668 = vld [vmem:[#allocation5 + $0x7c] sm:$0xf]
        %v669 = vld [vmem:[#allocation5 + $0x80] sm:$0xf]
        %v670 = vld [vmem:[#allocation5 + $0x84] sm:$0xf]
        %v671 = vld [vmem:[#allocation5 + $0x88] sm:$0xf]
        %v672 = vld [vmem:[#allocation5 + $0x8c] sm:$0xf]
        %v673 = vld [vmem:[#allocation5 + $0x90] sm:$0xf]
        %v674 = vld [vmem:[#allocation5 + $0x94] sm:$0xf]
        %v675 = vld [vmem:[#allocation5 + $0x98] sm:$0xf]
        %v676 = vld [vmem:[#allocation5 + $0x9c] sm:$0xf]
        %v677 = vld [vmem:[#allocation5 + $0xa0] sm:$0xf]
        %v678 = vld [vmem:[#allocation5 + $0xa4] sm:$0xf]
        %v679 = vld [vmem:[#allocation5 + $0xa8] sm:$0xf]
        %v680 = vld [vmem:[#allocation5 + $0xac] sm:$0xf]
        %v681 = vld [vmem:[#allocation5 + $0xb0] sm:$0xf]
        %v682 = vld [vmem:[#allocation5 + $0xb4] sm:$0xf]
        %v683 = vld [vmem:[#allocation5 + $0xb8] sm:$0xf]
        %v684 = vld [vmem:[#allocation5 + $0xbc] sm:$0xf]
        %v685 = vld [vmem:[#allocation5 + $0xc0] sm:$0xf]
        %v686 = vld [vmem:[#allocation5 + $0xc4] sm:$0xf]
        %v687 = vld [vmem:[#allocation5 + $0xc8] sm:$0xf]
        %v688 = vld [vmem:[#allocation5 + $0xcc] sm:$0xf]
        %v689 = vld [vmem:[#allocation5 + $0xd0] sm:$0xf]
        %v690 = vld [vmem:[#allocation5 + $0xd4] sm:$0xf]
        %v691 = vld [vmem:[#allocation5 + $0xd8] sm:$0xf]
        %v692 = vld [vmem:[#allocation5 + $0xdc] sm:$0xf]
        %v693 = vld [vmem:[#allocation5 + $0xe0] sm:$0xf]
        %v694 = vld [vmem:[#allocation5 + $0xe4] sm:$0xf]
        %v695 = vld [vmem:[#allocation5 + $0xe8] sm:$0xf]
        %v696 = vld [vmem:[#allocation5 + $0xec] sm:$0xf]
        %v697 = vld [vmem:[#allocation5 + $0xf0] sm:$0xf]
        %v698 = vld [vmem:[#allocation5 + $0xf4] sm:$0xf]
        %v699 = vld [vmem:[#allocation5 + $0xf8] sm:$0xf]
        %v700 = vld [vmem:[#allocation5 + $0xfc] sm:$0xf]
        %v701 = vld [vmem:[%s2] sm:$0x1]
        %v703 = vlaneseq
        %v704 = vshrl.u32 %v703, 7
        %v705 = vsub.s32 0, %v704
        %v706 = vrot.slane %v701, %v705
        %v772 = vunpack.c.l.b16 %v637
        %v773 = vunpack.c.l.b16 %v638
        %v774 = vunpack.c.l.b16 %v639
        %v775 = vunpack.c.l.b16 %v640
        %v776 = vunpack.c.l.b16 %v641
        %v777 = vunpack.c.l.b16 %v642
        %v778 = vunpack.c.l.b16 %v643
        %v779 = vunpack.c.l.b16 %v644
        %v780 = vunpack.c.l.b16 %v645
        %v781 = vunpack.c.l.b16 %v646
        %v782 = vunpack.c.l.b16 %v647
        %v783 = vunpack.c.l.b16 %v648
        %v784 = vunpack.c.l.b16 %v649
        %v785 = vunpack.c.l.b16 %v650
        %v786 = vunpack.c.l.b16 %v651
        %v787 = vunpack.c.l.b16 %v652
        %v788 = vunpack.c.l.b16 %v653
        %v789 = vunpack.c.l.b16 %v654
        %v790 = vunpack.c.l.b16 %v655
        %v791 = vunpack.c.l.b16 %v656
        %v792 = vunpack.c.l.b16 %v657
        %v793 = vunpack.c.l.b16 %v658
        %v794 = vunpack.c.l.b16 %v659
        %v795 = vunpack.c.l.b16 %v660
        %v796 = vunpack.c.l.b16 %v661
        %v797 = vunpack.c.l.b16 %v662
        %v798 = vunpack.c.l.b16 %v663
        %v799 = vunpack.c.l.b16 %v664
        %v800 = vunpack.c.l.b16 %v665
        %v801 = vunpack.c.l.b16 %v666
        %v802 = vunpack.c.l.b16 %v667
        %v803 = vunpack.c.l.b16 %v668
        %v804 = vunpack.c.l.b16 %v669
        %v805 = vunpack.c.l.b16 %v670
        %v806 = vunpack.c.l.b16 %v671
        %v807 = vunpack.c.l.b16 %v672
        %v808 = vunpack.c.l.b16 %v673
        %v809 = vunpack.c.l.b16 %v674
        %v810 = vunpack.c.l.b16 %v675
        %v811 = vunpack.c.l.b16 %v676
        %v812 = vunpack.c.l.b16 %v677
        %v813 = vunpack.c.l.b16 %v678
        %v814 = vunpack.c.l.b16 %v679
        %v815 = vunpack.c.l.b16 %v680
        %v816 = vunpack.c.l.b16 %v681
        %v817 = vunpack.c.l.b16 %v682
        %v818 = vunpack.c.l.b16 %v683
        %v819 = vunpack.c.l.b16 %v684
        %v820 = vunpack.c.l.b16 %v685
        %v821 = vunpack.c.l.b16 %v686
        %v822 = vunpack.c.l.b16 %v687
        %v823 = vunpack.c.l.b16 %v688
        %v824 = vunpack.c.l.b16 %v689
        %v825 = vunpack.c.l.b16 %v690
        %v826 = vunpack.c.l.b16 %v691
        %v827 = vunpack.c.l.b16 %v692
        %v828 = vunpack.c.l.b16 %v693
        %v829 = vunpack.c.l.b16 %v694
        %v830 = vunpack.c.l.b16 %v695
        %v831 = vunpack.c.l.b16 %v696
        %v832 = vunpack.c.l.b16 %v697
        %v833 = vunpack.c.l.b16 %v698
        %v834 = vunpack.c.l.b16 %v699
        %v835 = vunpack.c.l.b16 %v700
        %v836 = vpack.c.b16 %v773, %v772
        %v837 = vpack.c.b16 %v775, %v774
        %v838 = vpack.c.b16 %v777, %v776
        %v839 = vpack.c.b16 %v779, %v778
        %v840 = vpack.c.b16 %v781, %v780
        %v841 = vpack.c.b16 %v783, %v782
        %v842 = vpack.c.b16 %v785, %v784
        %v843 = vpack.c.b16 %v787, %v786
        %v844 = vpack.c.b16 %v789, %v788
        %v845 = vpack.c.b16 %v791, %v790
        %v846 = vpack.c.b16 %v793, %v792
        %v847 = vpack.c.b16 %v795, %v794
        %v848 = vpack.c.b16 %v797, %v796
        %v849 = vpack.c.b16 %v799, %v798
        %v850 = vpack.c.b16 %v801, %v800
        %v851 = vpack.c.b16 %v803, %v802
        %v852 = vpack.c.b16 %v805, %v804
        %v853 = vpack.c.b16 %v807, %v806
        %v854 = vpack.c.b16 %v809, %v808
        %v855 = vpack.c.b16 %v811, %v810
        %v856 = vpack.c.b16 %v813, %v812
        %v857 = vpack.c.b16 %v815, %v814
        %v858 = vpack.c.b16 %v817, %v816
        %v859 = vpack.c.b16 %v819, %v818
        %v860 = vpack.c.b16 %v821, %v820
        %v861 = vpack.c.b16 %v823, %v822
        %v862 = vpack.c.b16 %v825, %v824
        %v863 = vpack.c.b16 %v827, %v826
        %v864 = vpack.c.b16 %v829, %v828
        %v865 = vpack.c.b16 %v831, %v830
        %v866 = vpack.c.b16 %v833, %v832
        %v867 = vpack.c.b16 %v835, %v834
        %900 = vmatprep.subr.bf16.mxu0 0
        %901 = vmatpush1.bf16.msra.mxu0 %v836
        %902 = vmatprep.subr.bf16.mxu0 0
        %903 = vmatpush1.bf16.msra.mxu0 %v837
        %904 = vmatprep.subr.bf16.mxu0 0
        %905 = vmatpush1.bf16.msra.mxu0 %v838
        %906 = vmatprep.subr.bf16.mxu0 0
        %907 = vmatpush1.bf16.msra.mxu0 %v839
        %908 = vmatprep.subr.bf16.mxu0 0
        %909 = vmatpush1.bf16.msra.mxu0 %v840
        %910 = vmatprep.subr.bf16.mxu0 0
        %911 = vmatpush1.bf16.msra.mxu0 %v841
        %912 = vmatprep.subr.bf16.mxu0 0
        %913 = vmatpush1.bf16.msra.mxu0 %v842
        %914 = vmatprep.subr.bf16.mxu0 0
        %915 = vmatpush1.bf16.msra.mxu0 %v843
        %916 = vmatprep.subr.bf16.mxu0 0
        %917 = vmatpush1.bf16.msra.mxu0 %v844
        %918 = vmatprep.subr.bf16.mxu0 0
        %919 = vmatpush1.bf16.msra.mxu0 %v845
        %920 = vmatprep.subr.bf16.mxu0 0
        %921 = vmatpush1.bf16.msra.mxu0 %v846
        %922 = vmatprep.subr.bf16.mxu0 0
        %923 = vmatpush1.bf16.msra.mxu0 %v847
        %924 = vmatprep.subr.bf16.mxu0 0
        %925 = vmatpush1.bf16.msra.mxu0 %v848
        %926 = vmatprep.subr.bf16.mxu0 0
        %927 = vmatpush1.bf16.msra.mxu0 %v849
        %928 = vmatprep.subr.bf16.mxu0 0
        %929 = vmatpush1.bf16.msra.mxu0 %v850
        %930 = vmatprep.subr.bf16.mxu0 0
        %931 = vmatpush1.bf16.msra.mxu0 %v851
        %932 = vmatprep.mubr.bf16.mxu0 %v606
        %933 = vmatmul.mubr.bf16.gmra.mrb[0].mxu0 %v605
        %v934 = vpop.f32.mrb[0].mxu0
        %v935 = vadd.f32 %v706, %v934
        %v936 = vpop.f32.mrb[0].mxu0
        %v937 = vpop.f32.mrb[0].mxu0
        %v938 = vadd.f32 %v706, %v937
        %v939 = vpop.f32.mrb[0].mxu0
        %940 = vmatprep.mubr.bf16.mxu0 %v610
        %941 = vmatmul.mubr.bf16.gmra.mrb[0].mxu0 %v609
        %v942 = vpop.f32.mrb[0].mxu0
        %v943 = vadd.f32 %v706, %v942
        %v944 = vpop.f32.mrb[0].mxu0
        %v945 = vpop.f32.mrb[0].mxu0
        %v946 = vadd.f32 %v706, %v945
        %v947 = vpop.f32.mrb[0].mxu0
        %948 = vmatprep.mubr.bf16.mxu0 %v614
        %949 = vmatmul.mubr.bf16.gmra.mrb[0].mxu0 %v613
        %v950 = vpop.f32.mrb[0].mxu0
        %v951 = vadd.f32 %v706, %v950
        %v952 = vpop.f32.mrb[0].mxu0
        %v953 = vpop.f32.mrb[0].mxu0
        %v954 = vadd.f32 %v706, %v953
        %v955 = vpop.f32.mrb[0].mxu0
        %956 = vmatprep.mubr.bf16.mxu0 %v618
        %957 = vmatmul.mubr.bf16.gmra.mrb[0].mxu0 %v617
        %v958 = vpop.f32.mrb[0].mxu0
        %v959 = vadd.f32 %v706, %v958
        %v960 = vpop.f32.mrb[0].mxu0
        %v961 = vpop.f32.mrb[0].mxu0
        %v962 = vadd.f32 %v706, %v961
        %v963 = vpop.f32.mrb[0].mxu0
        %964 = vmatprep.mubr.bf16.mxu0 %v622
        %965 = vmatmul.mubr.bf16.gmra.mrb[0].mxu0 %v621
        %v966 = vpop.f32.mrb[0].mxu0
        %v967 = vadd.f32 %v706, %v966
        %v968 = vpop.f32.mrb[0].mxu0
        %v969 = vpop.f32.mrb[0].mxu0
        %v970 = vadd.f32 %v706, %v969
        %v971 = vpop.f32.mrb[0].mxu0
        %972 = vmatprep.mubr.bf16.mxu0 %v626
        %973 = vmatmul.mubr.bf16.gmra.mrb[0].mxu0 %v625
        %v974 = vpop.f32.mrb[0].mxu0
        %v975 = vadd.f32 %v706, %v974
        %v976 = vpop.f32.mrb[0].mxu0
        %v977 = vpop.f32.mrb[0].mxu0
        %v978 = vadd.f32 %v706, %v977
        %v979 = vpop.f32.mrb[0].mxu0
        %980 = vmatprep.mubr.bf16.mxu0 %v630
        %981 = vmatmul.mubr.bf16.gmra.mrb[0].mxu0 %v629
        %v982 = vpop.f32.mrb[0].mxu0
        %v983 = vadd.f32 %v706, %v982
        %v984 = vpop.f32.mrb[0].mxu0
        %v985 = vpop.f32.mrb[0].mxu0
        %v986 = vadd.f32 %v706, %v985
        %v987 = vpop.f32.mrb[0].mxu0
        %988 = vmatprep.mubr.bf16.mxu0 %v634
        %989 = vmatmul.mubr.bf16.gmra.mrb[0].mxu0 %v633
        %v990 = vpop.f32.mrb[0].mxu0
        %v991 = vadd.f32 %v706, %v990
        %v992 = vpop.f32.mrb[0].mxu0
        %v993 = vpop.f32.mrb[0].mxu0
        %v994 = vadd.f32 %v706, %v993
        %v995 = vpop.f32.mrb[0].mxu0
        %996 = vdwg.mxu0
        %997 = vmatprep.subr.bf16.mxu0 0
        %998 = vmatpush1.bf16.msra.mxu0 %v852
        %999 = vmatprep.subr.bf16.mxu0 0
        %1000 = vmatpush1.bf16.msra.mxu0 %v853
        %1001 = vmatprep.subr.bf16.mxu0 0
        %1002 = vmatpush1.bf16.msra.mxu0 %v854
        %1003 = vmatprep.subr.bf16.mxu0 0
        %1004 = vmatpush1.bf16.msra.mxu0 %v855
        %1005 = vmatprep.subr.bf16.mxu0 0
        %1006 = vmatpush1.bf16.msra.mxu0 %v856
        %1007 = vmatprep.subr.bf16.mxu0 0
        %1008 = vmatpush1.bf16.msra.mxu0 %v857
        %1009 = vmatprep.subr.bf16.mxu0 0
        %1010 = vmatpush1.bf16.msra.mxu0 %v858
        %1011 = vmatprep.subr.bf16.mxu0 0
        %1012 = vmatpush1.bf16.msra.mxu0 %v859
        %1013 = vmatprep.subr.bf16.mxu0 0
        %1014 = vmatpush1.bf16.msra.mxu0 %v860
        %1015 = vmatprep.subr.bf16.mxu0 0
        %1016 = vmatpush1.bf16.msra.mxu0 %v861
        %1017 = vmatprep.subr.bf16.mxu0 0
        %1018 = vmatpush1.bf16.msra.mxu0 %v862
        %1019 = vmatprep.subr.bf16.mxu0 0
        %1020 = vmatpush1.bf16.msra.mxu0 %v863
        %1021 = vmatprep.subr.bf16.mxu0 0
        %1022 = vmatpush1.bf16.msra.mxu0 %v864
        %1023 = vmatprep.subr.bf16.mxu0 0
        %1024 = vmatpush1.bf16.msra.mxu0 %v865
        %1025 = vmatprep.subr.bf16.mxu0 0
        %1026 = vmatpush1.bf16.msra.mxu0 %v866
        %1027 = vmatprep.subr.bf16.mxu0 0
        %1028 = vmatpush1.bf16.msra.mxu0 %v867
        %1029 = vmatprep.mubr.bf16.mxu0 %v608
        %1030 = vmatmul.mubr.bf16.gmra.mrb[0].mxu0 %v607
        %v1031 = vpop.f32.mrb[0].mxu0
        %v1032 = vadd.f32 %v935, %v1031
        %v1033 = vpop.f32.mrb[0].mxu0
        %v1034 = vpop.f32.mrb[0].mxu0
        %v1035 = vadd.f32 %v938, %v1034
        %v1036 = vpop.f32.mrb[0].mxu0
        %1037 = vmatprep.mubr.bf16.mxu0 %v612
        %1038 = vmatmul.mubr.bf16.gmra.mrb[0].mxu0 %v611
        %v1039 = vpop.f32.mrb[0].mxu0
        %v1040 = vadd.f32 %v943, %v1039
        %v1041 = vpop.f32.mrb[0].mxu0
        %v1042 = vpop.f32.mrb[0].mxu0
        %v1043 = vadd.f32 %v946, %v1042
        %v1044 = vpop.f32.mrb[0].mxu0
        %1045 = vmatprep.mubr.bf16.mxu0 %v616
        %1046 = vmatmul.mubr.bf16.gmra.mrb[0].mxu0 %v615
        %v1047 = vpop.f32.mrb[0].mxu0
        %v1048 = vadd.f32 %v951, %v1047
        %v1049 = vpop.f32.mrb[0].mxu0
        %v1050 = vpop.f32.mrb[0].mxu0
        %v1051 = vadd.f32 %v954, %v1050
        %v1052 = vpop.f32.mrb[0].mxu0
        %1053 = vmatprep.mubr.bf16.mxu0 %v620
        %1054 = vmatmul.mubr.bf16.gmra.mrb[0].mxu0 %v619
        %v1055 = vpop.f32.mrb[0].mxu0
        %v1056 = vadd.f32 %v959, %v1055
        %v1057 = vpop.f32.mrb[0].mxu0
        %v1058 = vpop.f32.mrb[0].mxu0
        %v1059 = vadd.f32 %v962, %v1058
        %v1060 = vpop.f32.mrb[0].mxu0
        %1061 = vmatprep.mubr.bf16.mxu0 %v624
        %1062 = vmatmul.mubr.bf16.gmra.mrb[0].mxu0 %v623
        %v1063 = vpop.f32.mrb[0].mxu0
        %v1064 = vadd.f32 %v967, %v1063
        %v1065 = vpop.f32.mrb[0].mxu0
        %v1066 = vpop.f32.mrb[0].mxu0
        %v1067 = vadd.f32 %v970, %v1066
        %v1068 = vpop.f32.mrb[0].mxu0
        %1069 = vmatprep.mubr.bf16.mxu0 %v628
        %1070 = vmatmul.mubr.bf16.gmra.mrb[0].mxu0 %v627
        %v1071 = vpop.f32.mrb[0].mxu0
        %v1072 = vadd.f32 %v975, %v1071
        %v1073 = vpop.f32.mrb[0].mxu0
        %v1074 = vpop.f32.mrb[0].mxu0
        %v1075 = vadd.f32 %v978, %v1074
        %v1076 = vpop.f32.mrb[0].mxu0
        %1077 = vmatprep.mubr.bf16.mxu0 %v632
        %1078 = vmatmul.mubr.bf16.gmra.mrb[0].mxu0 %v631
        %v1079 = vpop.f32.mrb[0].mxu0
        %v1080 = vadd.f32 %v983, %v1079
        %v1081 = vpop.f32.mrb[0].mxu0
        %v1082 = vpop.f32.mrb[0].mxu0
        %v1083 = vadd.f32 %v986, %v1082
        %v1084 = vpop.f32.mrb[0].mxu0
        %1085 = vmatprep.mubr.bf16.mxu0 %v636
        %1086 = vmatmul.mubr.bf16.gmra.mrb[0].mxu0 %v635
        %v1087 = vpop.f32.mrb[0].mxu0
        %v1088 = vadd.f32 %v991, %v1087
        %v1089 = vpop.f32.mrb[0].mxu0
        %v1090 = vpop.f32.mrb[0].mxu0
        %v1091 = vadd.f32 %v994, %v1090
        %v1092 = vpop.f32.mrb[0].mxu0
        %1093 = vdwg.mxu0
        %v1094 = vmax.f32 %v1032, 0.0
        %v1095 = vmax.f32 %v1035, 0.0
        %v1096 = vmax.f32 %v1040, 0.0
        %v1097 = vmax.f32 %v1043, 0.0
        %v1098 = vmax.f32 %v1048, 0.0
        %v1099 = vmax.f32 %v1051, 0.0
        %v1100 = vmax.f32 %v1056, 0.0
        %v1101 = vmax.f32 %v1059, 0.0
        %v1102 = vmax.f32 %v1064, 0.0
        %v1103 = vmax.f32 %v1067, 0.0
        %v1104 = vmax.f32 %v1072, 0.0
        %v1105 = vmax.f32 %v1075, 0.0
        %v1106 = vmax.f32 %v1080, 0.0
        %v1107 = vmax.f32 %v1083, 0.0
        %v1108 = vmax.f32 %v1088, 0.0
        %v1109 = vmax.f32 %v1091, 0.0
        %v1126 = vrot.slane %v1094, 7
        %v1127 = vrot.slane %v1095, 7
        %v1128 = vrot.slane %v1096, 7
        %v1129 = vrot.slane %v1097, 7
        %v1130 = vrot.slane %v1098, 7
        %v1131 = vrot.slane %v1099, 7
        %v1132 = vrot.slane %v1100, 7
        %v1133 = vrot.slane %v1101, 7
        %v1134 = vrot.slane %v1102, 7
        %v1135 = vrot.slane %v1103, 7
        %v1136 = vrot.slane %v1104, 7
        %v1137 = vrot.slane %v1105, 7
        %v1138 = vrot.slane %v1106, 7
        %v1139 = vrot.slane %v1107, 7
        %v1140 = vrot.slane %v1108, 7
        %v1141 = vrot.slane %v1109, 7
        %vm1158 = vcmask 1040384
        %v1159 = vsel %vm1158, 0.0, %v1126
        %v1160 = vsel %vm1158, 0.0, %v1127
        %v1161 = vsel %vm1158, 0.0, %v1128
        %v1162 = vsel %vm1158, 0.0, %v1129
        %v1163 = vsel %vm1158, 0.0, %v1130
        %v1164 = vsel %vm1158, 0.0, %v1131
        %v1165 = vsel %vm1158, 0.0, %v1132
        %v1166 = vsel %vm1158, 0.0, %v1133
        %v1167 = vsel %vm1158, 0.0, %v1134
        %v1168 = vsel %vm1158, 0.0, %v1135
        %v1169 = vsel %vm1158, 0.0, %v1136
        %v1170 = vsel %vm1158, 0.0, %v1137
        %v1171 = vsel %vm1158, 0.0, %v1138
        %v1172 = vsel %vm1158, 0.0, %v1139
        %v1173 = vsel %vm1158, 0.0, %v1140
        %v1174 = vsel %vm1158, 0.0, %v1141
        %v1175 = vrot.slane %v1094, 1
        %v1176 = vrot.slane %v1095, 1
        %v1177 = vrot.slane %v1096, 1
        %v1178 = vrot.slane %v1097, 1
        %v1179 = vrot.slane %v1098, 1
        %v1180 = vrot.slane %v1099, 1
        %v1181 = vrot.slane %v1100, 1
        %v1182 = vrot.slane %v1101, 1
        %v1183 = vrot.slane %v1102, 1
        %v1184 = vrot.slane %v1103, 1
        %v1185 = vrot.slane %v1104, 1
        %v1186 = vrot.slane %v1105, 1
        %v1187 = vrot.slane %v1106, 1
        %v1188 = vrot.slane %v1107, 1
        %v1189 = vrot.slane %v1108, 1
        %v1190 = vrot.slane %v1109, 1
        %vm1207 = vcmask 1046528
        %v1208 = vsel %vm1207, %v1175, 0.0
        %v1209 = vsel %vm1207, %v1176, 0.0
        %v1210 = vsel %vm1207, %v1177, 0.0
        %v1211 = vsel %vm1207, %v1178, 0.0
        %v1212 = vsel %vm1207, %v1179, 0.0
        %v1213 = vsel %vm1207, %v1180, 0.0
        %v1214 = vsel %vm1207, %v1181, 0.0
        %v1215 = vsel %vm1207, %v1182, 0.0
        %v1216 = vsel %vm1207, %v1183, 0.0
        %v1217 = vsel %vm1207, %v1184, 0.0
        %v1218 = vsel %vm1207, %v1185, 0.0
        %v1219 = vsel %vm1207, %v1186, 0.0
        %v1220 = vsel %vm1207, %v1187, 0.0
        %v1221 = vsel %vm1207, %v1188, 0.0
        %v1222 = vsel %vm1207, %v1189, 0.0
        %v1223 = vsel %vm1207, %v1190, 0.0
        %v1224 = vpack.c.bf16 %v1160, %v1159
        %v1225 = vpack.c.bf16 %v1095, %v1094
        %v1226 = vpack.c.bf16 %v1209, %v1208
        %v1227 = vpack.c.bf16 %v1162, %v1161
        %v1228 = vpack.c.bf16 %v1097, %v1096
        %v1229 = vpack.c.bf16 %v1211, %v1210
        %v1230 = vpack.c.bf16 %v1164, %v1163
        %v1231 = vpack.c.bf16 %v1099, %v1098
        %v1232 = vpack.c.bf16 %v1213, %v1212
        %v1233 = vpack.c.bf16 %v1166, %v1165
        %v1234 = vpack.c.bf16 %v1101, %v1100
        %v1235 = vpack.c.bf16 %v1215, %v1214
        %v1236 = vpack.c.bf16 %v1168, %v1167
        %v1237 = vpack.c.bf16 %v1103, %v1102
        %v1238 = vpack.c.bf16 %v1217, %v1216
        %v1239 = vpack.c.bf16 %v1170, %v1169
        %v1240 = vpack.c.bf16 %v1105, %v1104
        %v1241 = vpack.c.bf16 %v1219, %v1218
        %v1242 = vpack.c.bf16 %v1172, %v1171
        %v1243 = vpack.c.bf16 %v1107, %v1106
        %v1244 = vpack.c.bf16 %v1221, %v1220
        %v1245 = vpack.c.bf16 %v1174, %v1173
        %v1246 = vpack.c.bf16 %v1109, %v1108
        %v1247 = vpack.c.bf16 %v1223, %v1222
        %v1248 = vld [vmem:[#allocation7] sm:$0xf]
        %v1249 = vld [vmem:[#allocation7 + $0x4] sm:$0xf]
        %v1250 = vld [vmem:[#allocation7 + $0x8] sm:$0xf]
        %v1251 = vld [vmem:[#allocation7 + $0xc] sm:$0xf]
        %v1252 = vld [vmem:[#allocation7 + $0x10] sm:$0xf]
        %v1253 = vld [vmem:[#allocation7 + $0x14] sm:$0xf]
        %v1254 = vld [vmem:[#allocation7 + $0x18] sm:$0xf]
        %v1255 = vld [vmem:[#allocation7 + $0x1c] sm:$0xf]
        %v1256 = vld [vmem:[#allocation7 + $0x20] sm:$0xf]
        %v1257 = vld [vmem:[#allocation7 + $0x24] sm:$0xf]
        %v1258 = vld [vmem:[#allocation7 + $0x28] sm:$0xf]
        %v1259 = vld [vmem:[#allocation7 + $0x2c] sm:$0xf]
        %v1260 = vld [vmem:[#allocation7 + $0x30] sm:$0xf]
        %v1261 = vld [vmem:[#allocation7 + $0x34] sm:$0xf]
        %v1262 = vld [vmem:[#allocation7 + $0x38] sm:$0xf]
        %v1263 = vld [vmem:[#allocation7 + $0x3c] sm:$0xf]
        %v1264 = vld [vmem:[#allocation7 + $0x40] sm:$0xf]
        %v1265 = vld [vmem:[#allocation7 + $0x44] sm:$0xf]
        %v1266 = vld [vmem:[#allocation7 + $0x48] sm:$0xf]
        %v1267 = vld [vmem:[#allocation7 + $0x4c] sm:$0xf]
        %v1268 = vld [vmem:[#allocation7 + $0x50] sm:$0xf]
        %v1269 = vld [vmem:[#allocation7 + $0x54] sm:$0xf]
        %v1270 = vld [vmem:[#allocation7 + $0x58] sm:$0xf]
        %v1271 = vld [vmem:[#allocation7 + $0x5c] sm:$0xf]
        %v1272 = vld [vmem:[#allocation7 + $0x60] sm:$0xf]
        %v1273 = vld [vmem:[#allocation7 + $0x64] sm:$0xf]
        %v1274 = vld [vmem:[#allocation7 + $0x68] sm:$0xf]
        %v1275 = vld [vmem:[#allocation7 + $0x6c] sm:$0xf]
        %v1276 = vld [vmem:[#allocation7 + $0x70] sm:$0xf]
        %v1277 = vld [vmem:[#allocation7 + $0x74] sm:$0xf]
        %v1278 = vld [vmem:[#allocation7 + $0x78] sm:$0xf]
        %v1279 = vld [vmem:[#allocation7 + $0x7c] sm:$0xf]
        %v1280 = vld [vmem:[#allocation7 + $0x80] sm:$0xf]
        %v1281 = vld [vmem:[#allocation7 + $0x84] sm:$0xf]
        %v1282 = vld [vmem:[#allocation7 + $0x88] sm:$0xf]
        %v1283 = vld [vmem:[#allocation7 + $0x8c] sm:$0xf]
        %v1284 = vld [vmem:[#allocation7 + $0x90] sm:$0xf]
        %v1285 = vld [vmem:[#allocation7 + $0x94] sm:$0xf]
        %v1286 = vld [vmem:[#allocation7 + $0x98] sm:$0xf]
        %v1287 = vld [vmem:[#allocation7 + $0x9c] sm:$0xf]
        %v1288 = vld [vmem:[#allocation7 + $0xa0] sm:$0xf]
        %v1289 = vld [vmem:[#allocation7 + $0xa4] sm:$0xf]
        %v1290 = vld [vmem:[#allocation7 + $0xa8] sm:$0xf]
        %v1291 = vld [vmem:[#allocation7 + $0xac] sm:$0xf]
        %v1292 = vld [vmem:[#allocation7 + $0xb0] sm:$0xf]
        %v1293 = vld [vmem:[#allocation7 + $0xb4] sm:$0xf]
        %v1294 = vld [vmem:[#allocation7 + $0xb8] sm:$0xf]
        %v1295 = vld [vmem:[#allocation7 + $0xbc] sm:$0xf]
        %v1296 = vld [vmem:[%s4] sm:$0x1]
        %v1298 = vlaneseq
        %v1299 = vshrl.u32 %v1298, 7
        %v1300 = vsub.s32 0, %v1299
        %v1301 = vrot.slane %v1296, %v1300
        %v1351 = vunpack.c.l.b16 %v1248
        %v1352 = vunpack.c.l.b16 %v1249
        %v1353 = vunpack.c.l.b16 %v1250
        %v1354 = vunpack.c.l.b16 %v1251
        %v1355 = vunpack.c.l.b16 %v1252
        %v1356 = vunpack.c.l.b16 %v1253
        %v1357 = vunpack.c.l.b16 %v1254
        %v1358 = vunpack.c.l.b16 %v1255
        %v1359 = vunpack.c.l.b16 %v1256
        %v1360 = vunpack.c.l.b16 %v1257
        %v1361 = vunpack.c.l.b16 %v1258
        %v1362 = vunpack.c.l.b16 %v1259
        %v1363 = vunpack.c.l.b16 %v1260
        %v1364 = vunpack.c.l.b16 %v1261
        %v1365 = vunpack.c.l.b16 %v1262
        %v1366 = vunpack.c.l.b16 %v1263
        %v1367 = vunpack.c.l.b16 %v1264
        %v1368 = vunpack.c.l.b16 %v1265
        %v1369 = vunpack.c.l.b16 %v1266
        %v1370 = vunpack.c.l.b16 %v1267
        %v1371 = vunpack.c.l.b16 %v1268
        %v1372 = vunpack.c.l.b16 %v1269
        %v1373 = vunpack.c.l.b16 %v1270
        %v1374 = vunpack.c.l.b16 %v1271
        %v1375 = vunpack.c.l.b16 %v1272
        %v1376 = vunpack.c.l.b16 %v1273
        %v1377 = vunpack.c.l.b16 %v1274
        %v1378 = vunpack.c.l.b16 %v1275
        %v1379 = vunpack.c.l.b16 %v1276
        %v1380 = vunpack.c.l.b16 %v1277
        %v1381 = vunpack.c.l.b16 %v1278
        %v1382 = vunpack.c.l.b16 %v1279
        %v1383 = vunpack.c.l.b16 %v1280
        %v1384 = vunpack.c.l.b16 %v1281
        %v1385 = vunpack.c.l.b16 %v1282
        %v1386 = vunpack.c.l.b16 %v1283
        %v1387 = vunpack.c.l.b16 %v1284
        %v1388 = vunpack.c.l.b16 %v1285
        %v1389 = vunpack.c.l.b16 %v1286
        %v1390 = vunpack.c.l.b16 %v1287
        %v1391 = vunpack.c.l.b16 %v1288
        %v1392 = vunpack.c.l.b16 %v1289
        %v1393 = vunpack.c.l.b16 %v1290
        %v1394 = vunpack.c.l.b16 %v1291
        %v1395 = vunpack.c.l.b16 %v1292
        %v1396 = vunpack.c.l.b16 %v1293
        %v1397 = vunpack.c.l.b16 %v1294
        %v1398 = vunpack.c.l.b16 %v1295
        %v1399 = vpack.c.b16 %v1352, %v1351
        %v1400 = vpack.c.b16 %v1354, %v1353
        %v1401 = vpack.c.b16 %v1356, %v1355
        %v1402 = vpack.c.b16 %v1358, %v1357
        %v1403 = vpack.c.b16 %v1360, %v1359
        %v1404 = vpack.c.b16 %v1362, %v1361
        %v1405 = vpack.c.b16 %v1364, %v1363
        %v1406 = vpack.c.b16 %v1366, %v1365
        %v1407 = vpack.c.b16 %v1368, %v1367
        %v1408 = vpack.c.b16 %v1370, %v1369
        %v1409 = vpack.c.b16 %v1372, %v1371
        %v1410 = vpack.c.b16 %v1374, %v1373
        %v1411 = vpack.c.b16 %v1376, %v1375
        %v1412 = vpack.c.b16 %v1378, %v1377
        %v1413 = vpack.c.b16 %v1380, %v1379
        %v1414 = vpack.c.b16 %v1382, %v1381
        %v1415 = vpack.c.b16 %v1384, %v1383
        %v1416 = vpack.c.b16 %v1386, %v1385
        %v1417 = vpack.c.b16 %v1388, %v1387
        %v1418 = vpack.c.b16 %v1390, %v1389
        %v1419 = vpack.c.b16 %v1392, %v1391
        %v1420 = vpack.c.b16 %v1394, %v1393
        %v1421 = vpack.c.b16 %v1396, %v1395
        %v1422 = vpack.c.b16 %v1398, %v1397
        %1447 = vmatprep.subr.bf16.mxu0 0
        %1448 = vmatpush1.bf16.msra.mxu0 %v1399
        %1449 = vmatprep.subr.bf16.mxu0 0
        %1450 = vmatpush1.bf16.msra.mxu0 %v1400
        %1451 = vmatprep.subr.bf16.mxu0 0
        %1452 = vmatpush1.bf16.msra.mxu0 %v1401
        %1453 = vmatprep.subr.bf16.mxu0 0
        %1454 = vmatpush1.bf16.msra.mxu0 %v1402
        %1455 = vmatprep.subr.bf16.mxu0 0
        %1456 = vmatpush1.bf16.msra.mxu0 %v1403
        %1457 = vmatprep.subr.bf16.mxu0 0
        %1458 = vmatpush1.bf16.msra.mxu0 %v1404
        %1459 = vmatprep.subr.bf16.mxu0 0
        %1460 = vmatpush1.bf16.msra.mxu0 %v1405
        %1461 = vmatprep.subr.bf16.mxu0 0
        %1462 = vmatpush1.bf16.msra.mxu0 %v1406
        %1463 = vmatprep.subr.bf16.mxu0 0
        %1464 = vmatpush1.bf16.msra.mxu0 %v1407
        %1465 = vmatprep.subr.bf16.mxu0 0
        %1466 = vmatpush1.bf16.msra.mxu0 %v1408
        %1467 = vmatprep.subr.bf16.mxu0 0
        %1468 = vmatpush1.bf16.msra.mxu0 %v1409
        %1469 = vmatprep.subr.bf16.mxu0 0
        %1470 = vmatpush1.bf16.msra.mxu0 %v1410
        %1471 = vmatprep.subr.bf16.mxu0 0
        %1472 = vmatpush1.bf16.msra.mxu0 %v1411
        %1473 = vmatprep.subr.bf16.mxu0 0
        %1474 = vmatpush1.bf16.msra.mxu0 %v1412
        %1475 = vmatprep.subr.bf16.mxu0 0
        %1476 = vmatpush1.bf16.msra.mxu0 %v1413
        %1477 = vmatprep.subr.bf16.mxu0 0
        %1478 = vmatpush1.bf16.msra.mxu0 %v1414
        %1479 = vmatprep.mubr.bf16.mxu0 %v1225
        %1480 = vmatmul.mubr.bf16.gmra.mrb[0].mxu0 %v1224
        %v1481 = vpop.f32.mrb[0].mxu0
        %v1482 = vadd.f32 %v1301, %v1481
        %v1483 = vpop.f32.mrb[0].mxu0
        %v1484 = vpop.f32.mrb[0].mxu0
        %v1485 = vadd.f32 %v1301, %v1484
        %v1486 = vpop.f32.mrb[0].mxu0
        %1487 = vmatprep.mubr.bf16.mxu0 %v1228
        %1488 = vmatmul.mubr.bf16.gmra.mrb[0].mxu0 %v1227
        %v1489 = vpop.f32.mrb[0].mxu0
        %v1490 = vadd.f32 %v1301, %v1489
        %v1491 = vpop.f32.mrb[0].mxu0
        %v1492 = vpop.f32.mrb[0].mxu0
        %v1493 = vadd.f32 %v1301, %v1492
        %v1494 = vpop.f32.mrb[0].mxu0
        %1495 = vmatprep.mubr.bf16.mxu0 %v1231
        %1496 = vmatmul.mubr.bf16.gmra.mrb[0].mxu0 %v1230
        %v1497 = vpop.f32.mrb[0].mxu0
        %v1498 = vadd.f32 %v1301, %v1497
        %v1499 = vpop.f32.mrb[0].mxu0
        %v1500 = vpop.f32.mrb[0].mxu0
        %v1501 = vadd.f32 %v1301, %v1500
        %v1502 = vpop.f32.mrb[0].mxu0
        %1503 = vmatprep.mubr.bf16.mxu0 %v1234
        %1504 = vmatmul.mubr.bf16.gmra.mrb[0].mxu0 %v1233
        %v1505 = vpop.f32.mrb[0].mxu0
        %v1506 = vadd.f32 %v1301, %v1505
        %v1507 = vpop.f32.mrb[0].mxu0
        %v1508 = vpop.f32.mrb[0].mxu0
        %v1509 = vadd.f32 %v1301, %v1508
        %v1510 = vpop.f32.mrb[0].mxu0
        %1511 = vmatprep.mubr.bf16.mxu0 %v1237
        %1512 = vmatmul.mubr.bf16.gmra.mrb[0].mxu0 %v1236
        %v1513 = vpop.f32.mrb[0].mxu0
        %v1514 = vadd.f32 %v1301, %v1513
        %v1515 = vpop.f32.mrb[0].mxu0
        %v1516 = vpop.f32.mrb[0].mxu0
        %v1517 = vadd.f32 %v1301, %v1516
        %v1518 = vpop.f32.mrb[0].mxu0
        %1519 = vmatprep.mubr.bf16.mxu0 %v1240
        %1520 = vmatmul.mubr.bf16.gmra.mrb[0].mxu0 %v1239
        %v1521 = vpop.f32.mrb[0].mxu0
        %v1522 = vadd.f32 %v1301, %v1521
        %v1523 = vpop.f32.mrb[0].mxu0
        %v1524 = vpop.f32.mrb[0].mxu0
        %v1525 = vadd.f32 %v1301, %v1524
        %v1526 = vpop.f32.mrb[0].mxu0
        %1527 = vmatprep.mubr.bf16.mxu0 %v1243
        %1528 = vmatmul.mubr.bf16.gmra.mrb[0].mxu0 %v1242
        %v1529 = vpop.f32.mrb[0].mxu0
        %v1530 = vadd.f32 %v1301, %v1529
        %v1531 = vpop.f32.mrb[0].mxu0
        %v1532 = vpop.f32.mrb[0].mxu0
        %v1533 = vadd.f32 %v1301, %v1532
        %v1534 = vpop.f32.mrb[0].mxu0
        %1535 = vmatprep.mubr.bf16.mxu0 %v1246
        %1536 = vmatmul.mubr.bf16.gmra.mrb[0].mxu0 %v1245
        %v1537 = vpop.f32.mrb[0].mxu0
        %v1538 = vadd.f32 %v1301, %v1537
        %v1539 = vpop.f32.mrb[0].mxu0
        %v1540 = vpop.f32.mrb[0].mxu0
        %v1541 = vadd.f32 %v1301, %v1540
        %v1542 = vpop.f32.mrb[0].mxu0
        %1543 = vdwg.mxu0
        %1544 = vmatprep.subr.bf16.mxu0 0
        %1545 = vmatpush1.bf16.msra.mxu0 %v1415
        %1546 = vmatprep.subr.bf16.mxu0 0
        %1547 = vmatpush1.bf16.msra.mxu0 %v1416
        %1548 = vmatprep.subr.bf16.mxu0 0
        %1549 = vmatpush1.bf16.msra.mxu0 %v1417
        %1550 = vmatprep.subr.bf16.mxu0 0
        %1551 = vmatpush1.bf16.msra.mxu0 %v1418
        %1552 = vmatprep.subr.bf16.mxu0 0
        %1553 = vmatpush1.bf16.msra.mxu0 %v1419
        %1554 = vmatprep.subr.bf16.mxu0 0
        %1555 = vmatpush1.bf16.msra.mxu0 %v1420
        %1556 = vmatprep.subr.bf16.mxu0 0
        %1557 = vmatpush1.bf16.msra.mxu0 %v1421
        %1558 = vmatprep.subr.bf16.mxu0 0
        %1559 = vmatpush1.bf16.msra.mxu0 %v1422
        %1560 = vmatprep.subr.bf16.mxu0 0
        %1561 = vmatpush1.bf16.msra.mxu0 0
        %1562 = vmatprep.subr.bf16.mxu0 0
        %1563 = vmatpush1.bf16.msra.mxu0 0
        %1564 = vmatprep.subr.bf16.mxu0 0
        %1565 = vmatpush1.bf16.msra.mxu0 0
        %1566 = vmatprep.subr.bf16.mxu0 0
        %1567 = vmatpush1.bf16.msra.mxu0 0
        %1568 = vmatprep.subr.bf16.mxu0 0
        %1569 = vmatpush1.bf16.msra.mxu0 0
        %1570 = vmatprep.subr.bf16.mxu0 0
        %1571 = vmatpush1.bf16.msra.mxu0 0
        %1572 = vmatprep.subr.bf16.mxu0 0
        %1573 = vmatpush1.bf16.msra.mxu0 0
        %1574 = vmatprep.subr.bf16.mxu0 0
        %1575 = vmatpush1.bf16.msra.mxu0 0
        %1576 = vmatprep.mubr.bf16.mxu0 0
        %1577 = vmatmul.mubr.bf16.gmra.mrb[0].mxu0 %v1226
        %v1578 = vpop.f32.mrb[0].mxu0
        %v1579 = vadd.f32 %v1482, %v1578
        %v1580 = vpop.f32.mrb[0].mxu0
        %v1581 = vpop.f32.mrb[0].mxu0
        %v1582 = vadd.f32 %v1485, %v1581
        %v1583 = vpop.f32.mrb[0].mxu0
        %1584 = vmatprep.mubr.bf16.mxu0 0
        %1585 = vmatmul.mubr.bf16.gmra.mrb[0].mxu0 %v1229
        %v1586 = vpop.f32.mrb[0].mxu0
        %v1587 = vadd.f32 %v1490, %v1586
        %v1588 = vpop.f32.mrb[0].mxu0
        %v1589 = vpop.f32.mrb[0].mxu0
        %v1590 = vadd.f32 %v1493, %v1589
        %v1591 = vpop.f32.mrb[0].mxu0
        %1592 = vmatprep.mubr.bf16.mxu0 0
        %1593 = vmatmul.mubr.bf16.gmra.mrb[0].mxu0 %v1232
        %v1594 = vpop.f32.mrb[0].mxu0
        %v1595 = vadd.f32 %v1498, %v1594
        %v1596 = vpop.f32.mrb[0].mxu0
        %v1597 = vpop.f32.mrb[0].mxu0
        %v1598 = vadd.f32 %v1501, %v1597
        %v1599 = vpop.f32.mrb[0].mxu0
        %1600 = vmatprep.mubr.bf16.mxu0 0
        %1601 = vmatmul.mubr.bf16.gmra.mrb[0].mxu0 %v1235
        %v1602 = vpop.f32.mrb[0].mxu0
        %v1603 = vadd.f32 %v1506, %v1602
        %v1604 = vpop.f32.mrb[0].mxu0
        %v1605 = vpop.f32.mrb[0].mxu0
        %v1606 = vadd.f32 %v1509, %v1605
        %v1607 = vpop.f32.mrb[0].mxu0
        %1608 = vmatprep.mubr.bf16.mxu0 0
        %1609 = vmatmul.mubr.bf16.gmra.mrb[0].mxu0 %v1238
        %v1610 = vpop.f32.mrb[0].mxu0
        %v1611 = vadd.f32 %v1514, %v1610
        %v1612 = vpop.f32.mrb[0].mxu0
        %v1613 = vpop.f32.mrb[0].mxu0
        %v1614 = vadd.f32 %v1517, %v1613
        %v1615 = vpop.f32.mrb[0].mxu0
        %1616 = vmatprep.mubr.bf16.mxu0 0
        %1617 = vmatmul.mubr.bf16.gmra.mrb[0].mxu0 %v1241
        %v1618 = vpop.f32.mrb[0].mxu0
        %v1619 = vadd.f32 %v1522, %v1618
        %v1620 = vpop.f32.mrb[0].mxu0
        %v1621 = vpop.f32.mrb[0].mxu0
        %v1622 = vadd.f32 %v1525, %v1621
        %v1623 = vpop.f32.mrb[0].mxu0
        %1624 = vmatprep.mubr.bf16.mxu0 0
        %1625 = vmatmul.mubr.bf16.gmra.mrb[0].mxu0 %v1244
        %v1626 = vpop.f32.mrb[0].mxu0
        %v1627 = vadd.f32 %v1530, %v1626
        %v1628 = vpop.f32.mrb[0].mxu0
        %v1629 = vpop.f32.mrb[0].mxu0
        %v1630 = vadd.f32 %v1533, %v1629
        %v1631 = vpop.f32.mrb[0].mxu0
        %1632 = vmatprep.mubr.bf16.mxu0 0
        %1633 = vmatmul.mubr.bf16.gmra.mrb[0].mxu0 %v1247
        %v1634 = vpop.f32.mrb[0].mxu0
        %v1635 = vadd.f32 %v1538, %v1634
        %v1636 = vpop.f32.mrb[0].mxu0
        %v1637 = vpop.f32.mrb[0].mxu0
        %v1638 = vadd.f32 %v1541, %v1637
        %v1639 = vpop.f32.mrb[0].mxu0
        %1640 = vdwg.mxu0
        %v1641 = vmax.f32 %v1579, 0.0
        %v1642 = vmax.f32 %v1582, 0.0
        %v1643 = vmax.f32 %v1587, 0.0
        %v1644 = vmax.f32 %v1590, 0.0
        %v1645 = vmax.f32 %v1595, 0.0
        %v1646 = vmax.f32 %v1598, 0.0
        %v1647 = vmax.f32 %v1603, 0.0
        %v1648 = vmax.f32 %v1606, 0.0
        %v1649 = vmax.f32 %v1611, 0.0
        %v1650 = vmax.f32 %v1614, 0.0
        %v1651 = vmax.f32 %v1619, 0.0
        %v1652 = vmax.f32 %v1622, 0.0
        %v1653 = vmax.f32 %v1627, 0.0
        %v1654 = vmax.f32 %v1630, 0.0
        %v1655 = vmax.f32 %v1635, 0.0
        %v1656 = vmax.f32 %v1638, 0.0
        %v1673 = vrot.slane %v1641, 7
        %v1674 = vrot.slane %v1642, 7
        %v1675 = vrot.slane %v1643, 7
        %v1676 = vrot.slane %v1644, 7
        %v1677 = vrot.slane %v1645, 7
        %v1678 = vrot.slane %v1646, 7
        %v1679 = vrot.slane %v1647, 7
        %v1680 = vrot.slane %v1648, 7
        %v1681 = vrot.slane %v1649, 7
        %v1682 = vrot.slane %v1650, 7
        %v1683 = vrot.slane %v1651, 7
        %v1684 = vrot.slane %v1652, 7
        %v1685 = vrot.slane %v1653, 7
        %v1686 = vrot.slane %v1654, 7
        %v1687 = vrot.slane %v1655, 7
        %v1688 = vrot.slane %v1656, 7
        %v1705 = vsel %vm1158, 0.0, %v1673
        %v1706 = vsel %vm1158, 0.0, %v1674
        %v1707 = vsel %vm1158, 0.0, %v1675
        %v1708 = vsel %vm1158, 0.0, %v1676
        %v1709 = vsel %vm1158, 0.0, %v1677
        %v1710 = vsel %vm1158, 0.0, %v1678
        %v1711 = vsel %vm1158, 0.0, %v1679
        %v1712 = vsel %vm1158, 0.0, %v1680
        %v1713 = vsel %vm1158, 0.0, %v1681
        %v1714 = vsel %vm1158, 0.0, %v1682
        %v1715 = vsel %vm1158, 0.0, %v1683
        %v1716 = vsel %vm1158, 0.0, %v1684
        %v1717 = vsel %vm1158, 0.0, %v1685
        %v1718 = vsel %vm1158, 0.0, %v1686
        %v1719 = vsel %vm1158, 0.0, %v1687
        %v1720 = vsel %vm1158, 0.0, %v1688
        %v1721 = vrot.slane %v1641, 1
        %v1722 = vrot.slane %v1642, 1
        %v1723 = vrot.slane %v1643, 1
        %v1724 = vrot.slane %v1644, 1
        %v1725 = vrot.slane %v1645, 1
        %v1726 = vrot.slane %v1646, 1
        %v1727 = vrot.slane %v1647, 1
        %v1728 = vrot.slane %v1648, 1
        %v1729 = vrot.slane %v1649, 1
        %v1730 = vrot.slane %v1650, 1
        %v1731 = vrot.slane %v1651, 1
        %v1732 = vrot.slane %v1652, 1
        %v1733 = vrot.slane %v1653, 1
        %v1734 = vrot.slane %v1654, 1
        %v1735 = vrot.slane %v1655, 1
        %v1736 = vrot.slane %v1656, 1
        %v1753 = vsel %vm1207, %v1721, 0.0
        %v1754 = vsel %vm1207, %v1722, 0.0
        %v1755 = vsel %vm1207, %v1723, 0.0
        %v1756 = vsel %vm1207, %v1724, 0.0
        %v1757 = vsel %vm1207, %v1725, 0.0
        %v1758 = vsel %vm1207, %v1726, 0.0
        %v1759 = vsel %vm1207, %v1727, 0.0
        %v1760 = vsel %vm1207, %v1728, 0.0
        %v1761 = vsel %vm1207, %v1729, 0.0
        %v1762 = vsel %vm1207, %v1730, 0.0
        %v1763 = vsel %vm1207, %v1731, 0.0
        %v1764 = vsel %vm1207, %v1732, 0.0
        %v1765 = vsel %vm1207, %v1733, 0.0
        %v1766 = vsel %vm1207, %v1734, 0.0
        %v1767 = vsel %vm1207, %v1735, 0.0
        %v1768 = vsel %vm1207, %v1736, 0.0
        %v1769 = vpack.c.bf16 %v1706, %v1705
        %v1770 = vpack.c.bf16 %v1642, %v1641
        %v1771 = vpack.c.bf16 %v1754, %v1753
        %v1772 = vpack.c.bf16 %v1708, %v1707
        %v1773 = vpack.c.bf16 %v1644, %v1643
        %v1774 = vpack.c.bf16 %v1756, %v1755
        %v1775 = vpack.c.bf16 %v1710, %v1709
        %v1776 = vpack.c.bf16 %v1646, %v1645
        %v1777 = vpack.c.bf16 %v1758, %v1757
        %v1778 = vpack.c.bf16 %v1712, %v1711
        %v1779 = vpack.c.bf16 %v1648, %v1647
        %v1780 = vpack.c.bf16 %v1760, %v1759
        %v1781 = vpack.c.bf16 %v1714, %v1713
        %v1782 = vpack.c.bf16 %v1650, %v1649
        %v1783 = vpack.c.bf16 %v1762, %v1761
        %v1784 = vpack.c.bf16 %v1716, %v1715
        %v1785 = vpack.c.bf16 %v1652, %v1651
        %v1786 = vpack.c.bf16 %v1764, %v1763
        %v1787 = vpack.c.bf16 %v1718, %v1717
        %v1788 = vpack.c.bf16 %v1654, %v1653
        %v1789 = vpack.c.bf16 %v1766, %v1765
        %v1790 = vpack.c.bf16 %v1720, %v1719
        %v1791 = vpack.c.bf16 %v1656, %v1655
        %v1792 = vpack.c.bf16 %v1768, %v1767
        %v1793 = vld [vmem:[#allocation8] sm:$0xf]
        %v1794 = vld [vmem:[#allocation8 + $0x4] sm:$0xf]
        %v1795 = vld [vmem:[#allocation8 + $0x8] sm:$0xf]
        %v1796 = vld [vmem:[#allocation8 + $0xc] sm:$0xf]
        %v1797 = vld [vmem:[#allocation8 + $0x10] sm:$0xf]
        %v1798 = vld [vmem:[#allocation8 + $0x14] sm:$0xf]
        %v1799 = vld [vmem:[#allocation8 + $0x18] sm:$0xf]
        %v1800 = vld [vmem:[#allocation8 + $0x1c] sm:$0xf]
        %v1801 = vld [vmem:[#allocation8 + $0x20] sm:$0xf]
        %v1802 = vld [vmem:[#allocation8 + $0x24] sm:$0xf]
        %v1803 = vld [vmem:[#allocation8 + $0x28] sm:$0xf]
        %v1804 = vld [vmem:[#allocation8 + $0x2c] sm:$0xf]
        %v1805 = vld [vmem:[#allocation8 + $0x30] sm:$0xf]
        %v1806 = vld [vmem:[#allocation8 + $0x34] sm:$0xf]
        %v1807 = vld [vmem:[#allocation8 + $0x38] sm:$0xf]
        %v1808 = vld [vmem:[#allocation8 + $0x3c] sm:$0xf]
        %v1809 = vld [vmem:[#allocation8 + $0x40] sm:$0xf]
        %v1810 = vld [vmem:[#allocation8 + $0x44] sm:$0xf]
        %v1811 = vld [vmem:[#allocation8 + $0x48] sm:$0xf]
        %v1812 = vld [vmem:[#allocation8 + $0x4c] sm:$0xf]
        %v1813 = vld [vmem:[#allocation8 + $0x50] sm:$0xf]
        %v1814 = vld [vmem:[#allocation8 + $0x54] sm:$0xf]
        %v1815 = vld [vmem:[#allocation8 + $0x58] sm:$0xf]
        %v1816 = vld [vmem:[#allocation8 + $0x5c] sm:$0xf]
        %v1817 = vld [vmem:[#allocation8 + $0x60] sm:$0xf]
        %v1818 = vld [vmem:[#allocation8 + $0x64] sm:$0xf]
        %v1819 = vld [vmem:[#allocation8 + $0x68] sm:$0xf]
        %v1820 = vld [vmem:[#allocation8 + $0x6c] sm:$0xf]
        %v1821 = vld [vmem:[#allocation8 + $0x70] sm:$0xf]
        %v1822 = vld [vmem:[#allocation8 + $0x74] sm:$0xf]
        %v1823 = vld [vmem:[#allocation8 + $0x78] sm:$0xf]
        %v1824 = vld [vmem:[#allocation8 + $0x7c] sm:$0xf]
        %v1825 = vld [vmem:[#allocation8 + $0x80] sm:$0xf]
        %v1826 = vld [vmem:[#allocation8 + $0x84] sm:$0xf]
        %v1827 = vld [vmem:[#allocation8 + $0x88] sm:$0xf]
        %v1828 = vld [vmem:[#allocation8 + $0x8c] sm:$0xf]
        %v1829 = vld [vmem:[#allocation8 + $0x90] sm:$0xf]
        %v1830 = vld [vmem:[#allocation8 + $0x94] sm:$0xf]
        %v1831 = vld [vmem:[#allocation8 + $0x98] sm:$0xf]
        %v1832 = vld [vmem:[#allocation8 + $0x9c] sm:$0xf]
        %v1833 = vld [vmem:[#allocation8 + $0xa0] sm:$0xf]
        %v1834 = vld [vmem:[#allocation8 + $0xa4] sm:$0xf]
        %v1835 = vld [vmem:[#allocation8 + $0xa8] sm:$0xf]
        %v1836 = vld [vmem:[#allocation8 + $0xac] sm:$0xf]
        %v1837 = vld [vmem:[#allocation8 + $0xb0] sm:$0xf]
        %v1838 = vld [vmem:[#allocation8 + $0xb4] sm:$0xf]
        %v1839 = vld [vmem:[#allocation8 + $0xb8] sm:$0xf]
        %v1840 = vld [vmem:[#allocation8 + $0xbc] sm:$0xf]
        %v1841 = vld [vmem:[%s6] sm:$0x1]
        %v1843 = vlaneseq
        %v1844 = vshrl.u32 %v1843, 7
        %v1845 = vsub.s32 0, %v1844
        %v1846 = vrot.slane %v1841, %v1845
        %v1896 = vunpack.c.l.b16 %v1793
        %v1897 = vunpack.c.l.b16 %v1794
        %v1898 = vunpack.c.l.b16 %v1795
        %v1899 = vunpack.c.l.b16 %v1796
        %v1900 = vunpack.c.l.b16 %v1797
        %v1901 = vunpack.c.l.b16 %v1798
        %v1902 = vunpack.c.l.b16 %v1799
        %v1903 = vunpack.c.l.b16 %v1800
        %v1904 = vunpack.c.l.b16 %v1801
        %v1905 = vunpack.c.l.b16 %v1802
        %v1906 = vunpack.c.l.b16 %v1803
        %v1907 = vunpack.c.l.b16 %v1804
        %v1908 = vunpack.c.l.b16 %v1805
        %v1909 = vunpack.c.l.b16 %v1806
        %v1910 = vunpack.c.l.b16 %v1807
        %v1911 = vunpack.c.l.b16 %v1808
        %v1912 = vunpack.c.l.b16 %v1809
        %v1913 = vunpack.c.l.b16 %v1810
        %v1914 = vunpack.c.l.b16 %v1811
        %v1915 = vunpack.c.l.b16 %v1812
        %v1916 = vunpack.c.l.b16 %v1813
        %v1917 = vunpack.c.l.b16 %v1814
        %v1918 = vunpack.c.l.b16 %v1815
        %v1919 = vunpack.c.l.b16 %v1816
        %v1920 = vunpack.c.l.b16 %v1817
        %v1921 = vunpack.c.l.b16 %v1818
        %v1922 = vunpack.c.l.b16 %v1819
        %v1923 = vunpack.c.l.b16 %v1820
        %v1924 = vunpack.c.l.b16 %v1821
        %v1925 = vunpack.c.l.b16 %v1822
        %v1926 = vunpack.c.l.b16 %v1823
        %v1927 = vunpack.c.l.b16 %v1824
        %v1928 = vunpack.c.l.b16 %v1825
        %v1929 = vunpack.c.l.b16 %v1826
        %v1930 = vunpack.c.l.b16 %v1827
        %v1931 = vunpack.c.l.b16 %v1828
        %v1932 = vunpack.c.l.b16 %v1829
        %v1933 = vunpack.c.l.b16 %v1830
        %v1934 = vunpack.c.l.b16 %v1831
        %v1935 = vunpack.c.l.b16 %v1832
        %v1936 = vunpack.c.l.b16 %v1833
        %v1937 = vunpack.c.l.b16 %v1834
        %v1938 = vunpack.c.l.b16 %v1835
        %v1939 = vunpack.c.l.b16 %v1836
        %v1940 = vunpack.c.l.b16 %v1837
        %v1941 = vunpack.c.l.b16 %v1838
        %v1942 = vunpack.c.l.b16 %v1839
        %v1943 = vunpack.c.l.b16 %v1840
        %v1944 = vpack.c.b16 %v1897, %v1896
        %v1945 = vpack.c.b16 %v1899, %v1898
        %v1946 = vpack.c.b16 %v1901, %v1900
        %v1947 = vpack.c.b16 %v1903, %v1902
        %v1948 = vpack.c.b16 %v1905, %v1904
        %v1949 = vpack.c.b16 %v1907, %v1906
        %v1950 = vpack.c.b16 %v1909, %v1908
        %v1951 = vpack.c.b16 %v1911, %v1910
        %v1952 = vpack.c.b16 %v1913, %v1912
        %v1953 = vpack.c.b16 %v1915, %v1914
        %v1954 = vpack.c.b16 %v1917, %v1916
        %v1955 = vpack.c.b16 %v1919, %v1918
        %v1956 = vpack.c.b16 %v1921, %v1920
        %v1957 = vpack.c.b16 %v1923, %v1922
        %v1958 = vpack.c.b16 %v1925, %v1924
        %v1959 = vpack.c.b16 %v1927, %v1926
        %v1960 = vpack.c.b16 %v1929, %v1928
        %v1961 = vpack.c.b16 %v1931, %v1930
        %v1962 = vpack.c.b16 %v1933, %v1932
        %v1963 = vpack.c.b16 %v1935, %v1934
        %v1964 = vpack.c.b16 %v1937, %v1936
        %v1965 = vpack.c.b16 %v1939, %v1938
        %v1966 = vpack.c.b16 %v1941, %v1940
        %v1967 = vpack.c.b16 %v1943, %v1942
        %1992 = vmatprep.subr.bf16.mxu0 0
        %1993 = vmatpush1.bf16.msra.mxu0 %v1944
        %1994 = vmatprep.subr.bf16.mxu0 0
        %1995 = vmatpush1.bf16.msra.mxu0 %v1945
        %1996 = vmatprep.subr.bf16.mxu0 0
        %1997 = vmatpush1.bf16.msra.mxu0 %v1946
        %1998 = vmatprep.subr.bf16.mxu0 0
        %1999 = vmatpush1.bf16.msra.mxu0 %v1947
        %2000 = vmatprep.subr.bf16.mxu0 0
        %2001 = vmatpush1.bf16.msra.mxu0 %v1948
        %2002 = vmatprep.subr.bf16.mxu0 0
        %2003 = vmatpush1.bf16.msra.mxu0 %v1949
        %2004 = vmatprep.subr.bf16.mxu0 0
        %2005 = vmatpush1.bf16.msra.mxu0 %v1950
        %2006 = vmatprep.subr.bf16.mxu0 0
        %2007 = vmatpush1.bf16.msra.mxu0 %v1951
        %2008 = vmatprep.subr.bf16.mxu0 0
        %2009 = vmatpush1.bf16.msra.mxu0 %v1952
        %2010 = vmatprep.subr.bf16.mxu0 0
        %2011 = vmatpush1.bf16.msra.mxu0 %v1953
        %2012 = vmatprep.subr.bf16.mxu0 0
        %2013 = vmatpush1.bf16.msra.mxu0 %v1954
        %2014 = vmatprep.subr.bf16.mxu0 0
        %2015 = vmatpush1.bf16.msra.mxu0 %v1955
        %2016 = vmatprep.subr.bf16.mxu0 0
        %2017 = vmatpush1.bf16.msra.mxu0 %v1956
        %2018 = vmatprep.subr.bf16.mxu0 0
        %2019 = vmatpush1.bf16.msra.mxu0 %v1957
        %2020 = vmatprep.subr.bf16.mxu0 0
        %2021 = vmatpush1.bf16.msra.mxu0 %v1958
        %2022 = vmatprep.subr.bf16.mxu0 0
        %2023 = vmatpush1.bf16.msra.mxu0 %v1959
        %2024 = vmatprep.mubr.bf16.mxu0 %v1770
        %2025 = vmatmul.mubr.bf16.gmra.mrb[0].mxu0 %v1769
        %v2026 = vpop.f32.mrb[0].mxu0
        %v2027 = vadd.f32 %v1846, %v2026
        %v2028 = vpop.f32.mrb[0].mxu0
        %v2029 = vpop.f32.mrb[0].mxu0
        %v2030 = vadd.f32 %v1846, %v2029
        %v2031 = vpop.f32.mrb[0].mxu0
        %2032 = vmatprep.mubr.bf16.mxu0 %v1773
        %2033 = vmatmul.mubr.bf16.gmra.mrb[0].mxu0 %v1772
        %v2034 = vpop.f32.mrb[0].mxu0
        %v2035 = vadd.f32 %v1846, %v2034
        %v2036 = vpop.f32.mrb[0].mxu0
        %v2037 = vpop.f32.mrb[0].mxu0
        %v2038 = vadd.f32 %v1846, %v2037
        %v2039 = vpop.f32.mrb[0].mxu0
        %2040 = vmatprep.mubr.bf16.mxu0 %v1776
        %2041 = vmatmul.mubr.bf16.gmra.mrb[0].mxu0 %v1775
        %v2042 = vpop.f32.mrb[0].mxu0
        %v2043 = vadd.f32 %v1846, %v2042
        %v2044 = vpop.f32.mrb[0].mxu0
        %v2045 = vpop.f32.mrb[0].mxu0
        %v2046 = vadd.f32 %v1846, %v2045
        %v2047 = vpop.f32.mrb[0].mxu0
        %2048 = vmatprep.mubr.bf16.mxu0 %v1779
        %2049 = vmatmul.mubr.bf16.gmra.mrb[0].mxu0 %v1778
        %v2050 = vpop.f32.mrb[0].mxu0
        %v2051 = vadd.f32 %v1846, %v2050
        %v2052 = vpop.f32.mrb[0].mxu0
        %v2053 = vpop.f32.mrb[0].mxu0
        %v2054 = vadd.f32 %v1846, %v2053
        %v2055 = vpop.f32.mrb[0].mxu0
        %2056 = vmatprep.mubr.bf16.mxu0 %v1782
        %2057 = vmatmul.mubr.bf16.gmra.mrb[0].mxu0 %v1781
        %v2058 = vpop.f32.mrb[0].mxu0
        %v2059 = vadd.f32 %v1846, %v2058
        %v2060 = vpop.f32.mrb[0].mxu0
        %v2061 = vpop.f32.mrb[0].mxu0
        %v2062 = vadd.f32 %v1846, %v2061
        %v2063 = vpop.f32.mrb[0].mxu0
        %2064 = vmatprep.mubr.bf16.mxu0 %v1785
        %2065 = vmatmul.mubr.bf16.gmra.mrb[0].mxu0 %v1784
        %v2066 = vpop.f32.mrb[0].mxu0
        %v2067 = vadd.f32 %v1846, %v2066
        %v2068 = vpop.f32.mrb[0].mxu0
        %v2069 = vpop.f32.mrb[0].mxu0
        %v2070 = vadd.f32 %v1846, %v2069
        %v2071 = vpop.f32.mrb[0].mxu0
        %2072 = vmatprep.mubr.bf16.mxu0 %v1788
        %2073 = vmatmul.mubr.bf16.gmra.mrb[0].mxu0 %v1787
        %v2074 = vpop.f32.mrb[0].mxu0
        %v2075 = vadd.f32 %v1846, %v2074
        %v2076 = vpop.f32.mrb[0].mxu0
        %v2077 = vpop.f32.mrb[0].mxu0
        %v2078 = vadd.f32 %v1846, %v2077
        %v2079 = vpop.f32.mrb[0].mxu0
        %2080 = vmatprep.mubr.bf16.mxu0 %v1791
        %2081 = vmatmul.mubr.bf16.gmra.mrb[0].mxu0 %v1790
        %v2082 = vpop.f32.mrb[0].mxu0
        %v2083 = vadd.f32 %v1846, %v2082
        %v2084 = vpop.f32.mrb[0].mxu0
        %v2085 = vpop.f32.mrb[0].mxu0
        %v2086 = vadd.f32 %v1846, %v2085
        %v2087 = vpop.f32.mrb[0].mxu0
        %2088 = vdwg.mxu0
        %2089 = vmatprep.subr.bf16.mxu0 0
        %2090 = vmatpush1.bf16.msra.mxu0 %v1960
        %2091 = vmatprep.subr.bf16.mxu0 0
        %2092 = vmatpush1.bf16.msra.mxu0 %v1961
        %2093 = vmatprep.subr.bf16.mxu0 0
        %2094 = vmatpush1.bf16.msra.mxu0 %v1962
        %2095 = vmatprep.subr.bf16.mxu0 0
        %2096 = vmatpush1.bf16.msra.mxu0 %v1963
        %2097 = vmatprep.subr.bf16.mxu0 0
        %2098 = vmatpush1.bf16.msra.mxu0 %v1964
        %2099 = vmatprep.subr.bf16.mxu0 0
        %2100 = vmatpush1.bf16.msra.mxu0 %v1965
        %2101 = vmatprep.subr.bf16.mxu0 0
        %2102 = vmatpush1.bf16.msra.mxu0 %v1966
        %2103 = vmatprep.subr.bf16.mxu0 0
        %2104 = vmatpush1.bf16.msra.mxu0 %v1967
        %2105 = vmatprep.subr.bf16.mxu0 0
        %2106 = vmatpush1.bf16.msra.mxu0 0
        %2107 = vmatprep.subr.bf16.mxu0 0
        %2108 = vmatpush1.bf16.msra.mxu0 0
        %2109 = vmatprep.subr.bf16.mxu0 0
        %2110 = vmatpush1.bf16.msra.mxu0 0
        %2111 = vmatprep.subr.bf16.mxu0 0
        %2112 = vmatpush1.bf16.msra.mxu0 0
        %2113 = vmatprep.subr.bf16.mxu0 0
        %2114 = vmatpush1.bf16.msra.mxu0 0
        %2115 = vmatprep.subr.bf16.mxu0 0
        %2116 = vmatpush1.bf16.msra.mxu0 0
        %2117 = vmatprep.subr.bf16.mxu0 0
        %2118 = vmatpush1.bf16.msra.mxu0 0
        %2119 = vmatprep.subr.bf16.mxu0 0
        %2120 = vmatpush1.bf16.msra.mxu0 0
        %2121 = vmatprep.mubr.bf16.mxu0 0
        %2122 = vmatmul.mubr.bf16.gmra.mrb[0].mxu0 %v1771
        %v2123 = vpop.f32.mrb[0].mxu0
        %v2124 = vadd.f32 %v2027, %v2123
        %v2125 = vpop.f32.mrb[0].mxu0
        %v2126 = vpop.f32.mrb[0].mxu0
        %v2127 = vadd.f32 %v2030, %v2126
        %v2128 = vpop.f32.mrb[0].mxu0
        %2129 = vmatprep.mubr.bf16.mxu0 0
        %2130 = vmatmul.mubr.bf16.gmra.mrb[0].mxu0 %v1774
        %v2131 = vpop.f32.mrb[0].mxu0
        %v2132 = vadd.f32 %v2035, %v2131
        %v2133 = vpop.f32.mrb[0].mxu0
        %v2134 = vpop.f32.mrb[0].mxu0
        %v2135 = vadd.f32 %v2038, %v2134
        %v2136 = vpop.f32.mrb[0].mxu0
        %2137 = vmatprep.mubr.bf16.mxu0 0
        %2138 = vmatmul.mubr.bf16.gmra.mrb[0].mxu0 %v1777
        %v2139 = vpop.f32.mrb[0].mxu0
        %v2140 = vadd.f32 %v2043, %v2139
        %v2141 = vpop.f32.mrb[0].mxu0
        %v2142 = vpop.f32.mrb[0].mxu0
        %v2143 = vadd.f32 %v2046, %v2142
        %v2144 = vpop.f32.mrb[0].mxu0
        %2145 = vmatprep.mubr.bf16.mxu0 0
        %2146 = vmatmul.mubr.bf16.gmra.mrb[0].mxu0 %v1780
        %v2147 = vpop.f32.mrb[0].mxu0
        %v2148 = vadd.f32 %v2051, %v2147
        %v2149 = vpop.f32.mrb[0].mxu0
        %v2150 = vpop.f32.mrb[0].mxu0
        %v2151 = vadd.f32 %v2054, %v2150
        %v2152 = vpop.f32.mrb[0].mxu0
        %2153 = vmatprep.mubr.bf16.mxu0 0
        %2154 = vmatmul.mubr.bf16.gmra.mrb[0].mxu0 %v1783
        %v2155 = vpop.f32.mrb[0].mxu0
        %v2156 = vadd.f32 %v2059, %v2155
        %v2157 = vpop.f32.mrb[0].mxu0
        %v2158 = vpop.f32.mrb[0].mxu0
        %v2159 = vadd.f32 %v2062, %v2158
        %v2160 = vpop.f32.mrb[0].mxu0
        %2161 = vmatprep.mubr.bf16.mxu0 0
        %2162 = vmatmul.mubr.bf16.gmra.mrb[0].mxu0 %v1786
        %v2163 = vpop.f32.mrb[0].mxu0
        %v2164 = vadd.f32 %v2067, %v2163
        %v2165 = vpop.f32.mrb[0].mxu0
        %v2166 = vpop.f32.mrb[0].mxu0
        %v2167 = vadd.f32 %v2070, %v2166
        %v2168 = vpop.f32.mrb[0].mxu0
        %2169 = vmatprep.mubr.bf16.mxu0 0
        %2170 = vmatmul.mubr.bf16.gmra.mrb[0].mxu0 %v1789
        %v2171 = vpop.f32.mrb[0].mxu0
        %v2172 = vadd.f32 %v2075, %v2171
        %v2173 = vpop.f32.mrb[0].mxu0
        %v2174 = vpop.f32.mrb[0].mxu0
        %v2175 = vadd.f32 %v2078, %v2174
        %v2176 = vpop.f32.mrb[0].mxu0
        %2177 = vmatprep.mubr.bf16.mxu0 0
        %2178 = vmatmul.mubr.bf16.gmra.mrb[0].mxu0 %v1792
        %v2179 = vpop.f32.mrb[0].mxu0
        %v2180 = vadd.f32 %v2083, %v2179
        %v2181 = vpop.f32.mrb[0].mxu0
        %v2182 = vpop.f32.mrb[0].mxu0
        %v2183 = vadd.f32 %v2086, %v2182
        %v2184 = vpop.f32.mrb[0].mxu0
        %2185 = vdwg.mxu0
        %v2186 = vmax.f32 %v2124, 0.0
        %v2187 = vmax.f32 %v2127, 0.0
        %v2188 = vmax.f32 %v2132, 0.0
        %v2189 = vmax.f32 %v2135, 0.0
        %v2190 = vmax.f32 %v2140, 0.0
        %v2191 = vmax.f32 %v2143, 0.0
        %v2192 = vmax.f32 %v2148, 0.0
        %v2193 = vmax.f32 %v2151, 0.0
        %v2194 = vmax.f32 %v2156, 0.0
        %v2195 = vmax.f32 %v2159, 0.0
        %v2196 = vmax.f32 %v2164, 0.0
        %v2197 = vmax.f32 %v2167, 0.0
        %v2198 = vmax.f32 %v2172, 0.0
        %v2199 = vmax.f32 %v2175, 0.0
        %v2200 = vmax.f32 %v2180, 0.0
        %v2201 = vmax.f32 %v2183, 0.0
        %v2202 = vpack.c.bf16 %v2187, %v2186
        %v2203 = vpack.c.bf16 %v2189, %v2188
        %v2204 = vpack.c.bf16 %v2191, %v2190
        %v2205 = vpack.c.bf16 %v2193, %v2192
        %v2206 = vpack.c.bf16 %v2195, %v2194
        %v2207 = vpack.c.bf16 %v2197, %v2196
        %v2208 = vpack.c.bf16 %v2199, %v2198
        %v2209 = vpack.c.bf16 %v2201, %v2200
        %v2210 = vld [vmem:[#allocation10] sm:$0xff]
        %v2211 = vld [vmem:[#allocation10 + $0x8] sm:$0xff]
        %v2212 = vld [vmem:[#allocation10 + $0x10] sm:$0xff]
        %v2213 = vld [vmem:[#allocation10 + $0x18] sm:$0xff]
        %v2214 = vld [vmem:[#allocation10 + $0x20] sm:$0xff]
        %v2215 = vld [vmem:[#allocation10 + $0x28] sm:$0xff]
        %v2216 = vld [vmem:[#allocation10 + $0x30] sm:$0xff]
        %v2217 = vld [vmem:[#allocation10 + $0x38] sm:$0xff]
        %v2218 = vld [vmem:[#allocation10 + $0x40] sm:$0xff]
        %v2219 = vld [vmem:[#allocation10 + $0x48] sm:$0xff]
        %v2220 = vld [vmem:[#allocation10 + $0x50] sm:$0xff]
        %v2221 = vld [vmem:[#allocation10 + $0x58] sm:$0xff]
        %v2222 = vld [vmem:[#allocation10 + $0x60] sm:$0xff]
        %v2223 = vld [vmem:[#allocation10 + $0x68] sm:$0xff]
        %v2224 = vld [vmem:[#allocation10 + $0x70] sm:$0xff]
        %v2225 = vld [vmem:[#allocation10 + $0x78] sm:$0xff]
        %v2226 = vld [vmem:[#allocation10 + $0x80] sm:$0xff]
        %v2227 = vld [vmem:[#allocation10 + $0x88] sm:$0xff]
        %v2228 = vld [vmem:[#allocation10 + $0x90] sm:$0xff]
        %v2229 = vld [vmem:[#allocation10 + $0x98] sm:$0xff]
        %v2230 = vld [vmem:[#allocation10 + $0xa0] sm:$0xff]
        %v2231 = vld [vmem:[#allocation10 + $0xa8] sm:$0xff]
        %v2232 = vld [vmem:[#allocation10 + $0xb0] sm:$0xff]
        %v2233 = vld [vmem:[#allocation10 + $0xb8] sm:$0xff]
        %v2234 = vld [vmem:[#allocation10 + $0xc0] sm:$0xff]
        %v2235 = vld [vmem:[#allocation10 + $0xc8] sm:$0xff]
        %v2236 = vld [vmem:[#allocation10 + $0xd0] sm:$0xff]
        %v2237 = vld [vmem:[#allocation10 + $0xd8] sm:$0xff]
        %v2238 = vld [vmem:[#allocation10 + $0xe0] sm:$0xff]
        %v2239 = vld [vmem:[#allocation10 + $0xe8] sm:$0xff]
        %v2240 = vld [vmem:[#allocation10 + $0xf0] sm:$0xff]
        %v2241 = vld [vmem:[#allocation10 + $0xf8] sm:$0xff]
        %v2242 = vld [vmem:[%s8] sm:$0xf]
        %v2244 = vlaneseq
        %v2245 = vshrl.u32 %v2244, 7
        %v2246 = vsub.s32 0, %v2245
        %v2247 = vrot.slane %v2242, %v2246
        %v2248 = vlaneseq
        %v2249 = vshrl.u32 %v2248, 7
        %v2250 = vsub.s32 1, %v2249
        %v2251 = vrot.slane %v2242, %v2250
        %v2252 = vlaneseq
        %v2253 = vshrl.u32 %v2252, 7
        %v2254 = vsub.s32 2, %v2253
        %v2255 = vrot.slane %v2242, %v2254
        %v2256 = vlaneseq
        %v2257 = vshrl.u32 %v2256, 7
        %v2258 = vsub.s32 3, %v2257
        %v2259 = vrot.slane %v2242, %v2258
        %v2296 = vunpack.c.l.b16 %v2210
        %v2297 = vunpack.c.h.b16 %v2210
        %v2298 = vunpack.c.l.b16 %v2211
        %v2299 = vunpack.c.h.b16 %v2211
        %v2300 = vunpack.c.l.b16 %v2212
        %v2301 = vunpack.c.h.b16 %v2212
        %v2302 = vunpack.c.l.b16 %v2213
        %v2303 = vunpack.c.h.b16 %v2213
        %v2304 = vunpack.c.l.b16 %v2214
        %v2305 = vunpack.c.h.b16 %v2214
        %v2306 = vunpack.c.l.b16 %v2215
        %v2307 = vunpack.c.h.b16 %v2215
        %v2308 = vunpack.c.l.b16 %v2216
        %v2309 = vunpack.c.h.b16 %v2216
        %v2310 = vunpack.c.l.b16 %v2217
        %v2311 = vunpack.c.h.b16 %v2217
        %v2312 = vunpack.c.l.b16 %v2218
        %v2313 = vunpack.c.h.b16 %v2218
        %v2314 = vunpack.c.l.b16 %v2219
        %v2315 = vunpack.c.h.b16 %v2219
        %v2316 = vunpack.c.l.b16 %v2220
        %v2317 = vunpack.c.h.b16 %v2220
        %v2318 = vunpack.c.l.b16 %v2221
        %v2319 = vunpack.c.h.b16 %v2221
        %v2320 = vunpack.c.l.b16 %v2222
        %v2321 = vunpack.c.h.b16 %v2222
        %v2322 = vunpack.c.l.b16 %v2223
        %v2323 = vunpack.c.h.b16 %v2223
        %v2324 = vunpack.c.l.b16 %v2224
        %v2325 = vunpack.c.h.b16 %v2224
        %v2326 = vunpack.c.l.b16 %v2225
        %v2327 = vunpack.c.h.b16 %v2225
        %v2328 = vunpack.c.l.b16 %v2226
        %v2329 = vunpack.c.h.b16 %v2226
        %v2330 = vunpack.c.l.b16 %v2227
        %v2331 = vunpack.c.h.b16 %v2227
        %v2332 = vunpack.c.l.b16 %v2228
        %v2333 = vunpack.c.h.b16 %v2228
        %v2334 = vunpack.c.l.b16 %v2229
        %v2335 = vunpack.c.h.b16 %v2229
        %v2336 = vunpack.c.l.b16 %v2230
        %v2337 = vunpack.c.h.b16 %v2230
        %v2338 = vunpack.c.l.b16 %v2231
        %v2339 = vunpack.c.h.b16 %v2231
        %v2340 = vunpack.c.l.b16 %v2232
        %v2341 = vunpack.c.h.b16 %v2232
        %v2342 = vunpack.c.l.b16 %v2233
        %v2343 = vunpack.c.h.b16 %v2233
        %v2344 = vunpack.c.l.b16 %v2234
        %v2345 = vunpack.c.h.b16 %v2234
        %v2346 = vunpack.c.l.b16 %v2235
        %v2347 = vunpack.c.h.b16 %v2235
        %v2348 = vunpack.c.l.b16 %v2236
        %v2349 = vunpack.c.h.b16 %v2236
        %v2350 = vunpack.c.l.b16 %v2237
        %v2351 = vunpack.c.h.b16 %v2237
        %v2352 = vunpack.c.l.b16 %v2238
        %v2353 = vunpack.c.h.b16 %v2238
        %v2354 = vunpack.c.l.b16 %v2239
        %v2355 = vunpack.c.h.b16 %v2239
        %v2356 = vunpack.c.l.b16 %v2240
        %v2357 = vunpack.c.h.b16 %v2240
        %v2358 = vunpack.c.l.b16 %v2241
        %v2359 = vunpack.c.h.b16 %v2241
        %v2360 = vpack.c.b16 %v2300, %v2296
        %v2361 = vpack.c.b16 %v2301, %v2297
        %v2362 = vpack.c.b16 %v2302, %v2298
        %v2363 = vpack.c.b16 %v2303, %v2299
        %v2364 = vpack.c.b16 %v2308, %v2304
        %v2365 = vpack.c.b16 %v2309, %v2305
        %v2366 = vpack.c.b16 %v2310, %v2306
        %v2367 = vpack.c.b16 %v2311, %v2307
        %v2368 = vpack.c.b16 %v2316, %v2312
        %v2369 = vpack.c.b16 %v2317, %v2313
        %v2370 = vpack.c.b16 %v2318, %v2314
        %v2371 = vpack.c.b16 %v2319, %v2315
        %v2372 = vpack.c.b16 %v2324, %v2320
        %v2373 = vpack.c.b16 %v2325, %v2321
        %v2374 = vpack.c.b16 %v2326, %v2322
        %v2375 = vpack.c.b16 %v2327, %v2323
        %v2376 = vpack.c.b16 %v2332, %v2328
        %v2377 = vpack.c.b16 %v2333, %v2329
        %v2378 = vpack.c.b16 %v2334, %v2330
        %v2379 = vpack.c.b16 %v2335, %v2331
        %v2380 = vpack.c.b16 %v2340, %v2336
        %v2381 = vpack.c.b16 %v2341, %v2337
        %v2382 = vpack.c.b16 %v2342, %v2338
        %v2383 = vpack.c.b16 %v2343, %v2339
        %v2384 = vpack.c.b16 %v2348, %v2344
        %v2385 = vpack.c.b16 %v2349, %v2345
        %v2386 = vpack.c.b16 %v2350, %v2346
        %v2387 = vpack.c.b16 %v2351, %v2347
        %v2388 = vpack.c.b16 %v2356, %v2352
        %v2389 = vpack.c.b16 %v2357, %v2353
        %v2390 = vpack.c.b16 %v2358, %v2354
        %v2391 = vpack.c.b16 %v2359, %v2355
        %2424 = vmatprep.subr.bf16.mxu0 %v2361
        %2425 = vmatpush1.bf16.msra.mxu0 %v2360
        %2426 = vmatprep.subr.bf16.mxu0 %v2365
        %2427 = vmatpush1.bf16.msra.mxu0 %v2364
        %2428 = vmatprep.subr.bf16.mxu0 %v2369
        %2429 = vmatpush1.bf16.msra.mxu0 %v2368
        %2430 = vmatprep.subr.bf16.mxu0 %v2373
        %2431 = vmatpush1.bf16.msra.mxu0 %v2372
        %2432 = vmatprep.subr.bf16.mxu0 %v2377
        %2433 = vmatpush1.bf16.msra.mxu0 %v2376
        %2434 = vmatprep.subr.bf16.mxu0 %v2381
        %2435 = vmatpush1.bf16.msra.mxu0 %v2380
        %2436 = vmatprep.subr.bf16.mxu0 %v2385
        %2437 = vmatpush1.bf16.msra.mxu0 %v2384
        %2438 = vmatprep.subr.bf16.mxu0 %v2389
        %2439 = vmatpush1.bf16.msra.mxu0 %v2388
        %2440 = vmatprep.subr.bf16.mxu0 0
        %2441 = vmatpush1.bf16.msra.mxu0 0
        %2442 = vmatprep.subr.bf16.mxu0 0
        %2443 = vmatpush1.bf16.msra.mxu0 0
        %2444 = vmatprep.subr.bf16.mxu0 0
        %2445 = vmatpush1.bf16.msra.mxu0 0
        %2446 = vmatprep.subr.bf16.mxu0 0
        %2447 = vmatpush1.bf16.msra.mxu0 0
        %2448 = vmatprep.subr.bf16.mxu0 0
        %2449 = vmatpush1.bf16.msra.mxu0 0
        %2450 = vmatprep.subr.bf16.mxu0 0
        %2451 = vmatpush1.bf16.msra.mxu0 0
        %2452 = vmatprep.subr.bf16.mxu0 0
        %2453 = vmatpush1.bf16.msra.mxu0 0
        %2454 = vmatprep.subr.bf16.mxu0 0
        %2455 = vmatpush1.bf16.msra.mxu0 0
        %2456 = vmatprep.mubr.bf16.mxu0 0
        %2457 = vmatmul.mubr.bf16.gmra.mrb[0].mxu0 %v2202
        %v2458 = vpop.f32.mrb[0].mxu0
        %v2459 = vadd.f32 %v2247, %v2458
        %v2460 = vpop.f32.mrb[0].mxu0
        %v2461 = vadd.f32 %v2251, %v2460
        %v2462 = vpop.f32.mrb[0].mxu0
        %v2463 = vadd.f32 %v2247, %v2462
        %v2464 = vpop.f32.mrb[0].mxu0
        %v2465 = vadd.f32 %v2251, %v2464
        %2466 = vmatprep.mubr.bf16.mxu0 0
        %2467 = vmatmul.mubr.bf16.gmra.mrb[0].mxu0 %v2203
        %v2468 = vpop.f32.mrb[0].mxu0
        %v2469 = vadd.f32 %v2247, %v2468
        %v2470 = vpop.f32.mrb[0].mxu0
        %v2471 = vadd.f32 %v2251, %v2470
        %v2472 = vpop.f32.mrb[0].mxu0
        %v2473 = vadd.f32 %v2247, %v2472
        %v2474 = vpop.f32.mrb[0].mxu0
        %v2475 = vadd.f32 %v2251, %v2474
        %2476 = vmatprep.mubr.bf16.mxu0 0
        %2477 = vmatmul.mubr.bf16.gmra.mrb[0].mxu0 %v2204
        %v2478 = vpop.f32.mrb[0].mxu0
        %v2479 = vadd.f32 %v2247, %v2478
        %v2480 = vpop.f32.mrb[0].mxu0
        %v2481 = vadd.f32 %v2251, %v2480
        %v2482 = vpop.f32.mrb[0].mxu0
        %v2483 = vadd.f32 %v2247, %v2482
        %v2484 = vpop.f32.mrb[0].mxu0
        %v2485 = vadd.f32 %v2251, %v2484
        %2486 = vmatprep.mubr.bf16.mxu0 0
        %2487 = vmatmul.mubr.bf16.gmra.mrb[0].mxu0 %v2205
        %v2488 = vpop.f32.mrb[0].mxu0
        %v2489 = vadd.f32 %v2247, %v2488
        %v2490 = vpop.f32.mrb[0].mxu0
        %v2491 = vadd.f32 %v2251, %v2490
        %v2492 = vpop.f32.mrb[0].mxu0
        %v2493 = vadd.f32 %v2247, %v2492
        %v2494 = vpop.f32.mrb[0].mxu0
        %v2495 = vadd.f32 %v2251, %v2494
        %2496 = vmatprep.mubr.bf16.mxu0 0
        %2497 = vmatmul.mubr.bf16.gmra.mrb[0].mxu0 %v2206
        %v2498 = vpop.f32.mrb[0].mxu0
        %v2499 = vadd.f32 %v2247, %v2498
        %v2500 = vpop.f32.mrb[0].mxu0
        %v2501 = vadd.f32 %v2251, %v2500
        %v2502 = vpop.f32.mrb[0].mxu0
        %v2503 = vadd.f32 %v2247, %v2502
        %v2504 = vpop.f32.mrb[0].mxu0
        %v2505 = vadd.f32 %v2251, %v2504
        %2506 = vmatprep.mubr.bf16.mxu0 0
        %2507 = vmatmul.mubr.bf16.gmra.mrb[0].mxu0 %v2207
        %v2508 = vpop.f32.mrb[0].mxu0
        %v2509 = vadd.f32 %v2247, %v2508
        %v2510 = vpop.f32.mrb[0].mxu0
        %v2511 = vadd.f32 %v2251, %v2510
        %v2512 = vpop.f32.mrb[0].mxu0
        %v2513 = vadd.f32 %v2247, %v2512
        %v2514 = vpop.f32.mrb[0].mxu0
        %v2515 = vadd.f32 %v2251, %v2514
        %2516 = vmatprep.mubr.bf16.mxu0 0
        %2517 = vmatmul.mubr.bf16.gmra.mrb[0].mxu0 %v2208
        %v2518 = vpop.f32.mrb[0].mxu0
        %v2519 = vadd.f32 %v2247, %v2518
        %v2520 = vpop.f32.mrb[0].mxu0
        %v2521 = vadd.f32 %v2251, %v2520
        %v2522 = vpop.f32.mrb[0].mxu0
        %v2523 = vadd.f32 %v2247, %v2522
        %v2524 = vpop.f32.mrb[0].mxu0
        %v2525 = vadd.f32 %v2251, %v2524
        %2526 = vmatprep.mubr.bf16.mxu0 0
        %2527 = vmatmul.mubr.bf16.gmra.mrb[0].mxu0 %v2209
        %v2528 = vpop.f32.mrb[0].mxu0
        %v2529 = vadd.f32 %v2247, %v2528
        %v2530 = vpop.f32.mrb[0].mxu0
        %v2531 = vadd.f32 %v2251, %v2530
        %v2532 = vpop.f32.mrb[0].mxu0
        %v2533 = vadd.f32 %v2247, %v2532
        %v2534 = vpop.f32.mrb[0].mxu0
        %v2535 = vadd.f32 %v2251, %v2534
        %2536 = vdwg.mxu0
        %2537 = vmatprep.subr.bf16.mxu0 %v2363
        %2538 = vmatpush1.bf16.msra.mxu0 %v2362
        %2539 = vmatprep.subr.bf16.mxu0 %v2367
        %2540 = vmatpush1.bf16.msra.mxu0 %v2366
        %2541 = vmatprep.subr.bf16.mxu0 %v2371
        %2542 = vmatpush1.bf16.msra.mxu0 %v2370
        %2543 = vmatprep.subr.bf16.mxu0 %v2375
        %2544 = vmatpush1.bf16.msra.mxu0 %v2374
        %2545 = vmatprep.subr.bf16.mxu0 %v2379
        %2546 = vmatpush1.bf16.msra.mxu0 %v2378
        %2547 = vmatprep.subr.bf16.mxu0 %v2383
        %2548 = vmatpush1.bf16.msra.mxu0 %v2382
        %2549 = vmatprep.subr.bf16.mxu0 %v2387
        %2550 = vmatpush1.bf16.msra.mxu0 %v2386
        %2551 = vmatprep.subr.bf16.mxu0 %v2391
        %2552 = vmatpush1.bf16.msra.mxu0 %v2390
        %2553 = vmatprep.subr.bf16.mxu0 0
        %2554 = vmatpush1.bf16.msra.mxu0 0
        %2555 = vmatprep.subr.bf16.mxu0 0
        %2556 = vmatpush1.bf16.msra.mxu0 0
        %2557 = vmatprep.subr.bf16.mxu0 0
        %2558 = vmatpush1.bf16.msra.mxu0 0
        %2559 = vmatprep.subr.bf16.mxu0 0
        %2560 = vmatpush1.bf16.msra.mxu0 0
        %2561 = vmatprep.subr.bf16.mxu0 0
        %2562 = vmatpush1.bf16.msra.mxu0 0
        %2563 = vmatprep.subr.bf16.mxu0 0
        %2564 = vmatpush1.bf16.msra.mxu0 0
        %2565 = vmatprep.subr.bf16.mxu0 0
        %2566 = vmatpush1.bf16.msra.mxu0 0
        %2567 = vmatprep.subr.bf16.mxu0 0
        %2568 = vmatpush1.bf16.msra.mxu0 0
        %2569 = vmatprep.mubr.bf16.mxu0 0
        %2570 = vmatmul.mubr.bf16.gmra.mrb[0].mxu0 %v2202
        %v2571 = vpop.f32.mrb[0].mxu0
        %v2572 = vadd.f32 %v2255, %v2571
        %v2573 = vpop.f32.mrb[0].mxu0
        %v2574 = vadd.f32 %v2259, %v2573
        %v2575 = vpop.f32.mrb[0].mxu0
        %v2576 = vadd.f32 %v2255, %v2575
        %v2577 = vpop.f32.mrb[0].mxu0
        %v2578 = vadd.f32 %v2259, %v2577
        %2579 = vmatprep.mubr.bf16.mxu0 0
        %2580 = vmatmul.mubr.bf16.gmra.mrb[0].mxu0 %v2203
        %v2581 = vpop.f32.mrb[0].mxu0
        %v2582 = vadd.f32 %v2255, %v2581
        %v2583 = vpop.f32.mrb[0].mxu0
        %v2584 = vadd.f32 %v2259, %v2583
        %v2585 = vpop.f32.mrb[0].mxu0
        %v2586 = vadd.f32 %v2255, %v2585
        %v2587 = vpop.f32.mrb[0].mxu0
        %v2588 = vadd.f32 %v2259, %v2587
        %2589 = vmatprep.mubr.bf16.mxu0 0
        %2590 = vmatmul.mubr.bf16.gmra.mrb[0].mxu0 %v2204
        %v2591 = vpop.f32.mrb[0].mxu0
        %v2592 = vadd.f32 %v2255, %v2591
        %v2593 = vpop.f32.mrb[0].mxu0
        %v2594 = vadd.f32 %v2259, %v2593
        %v2595 = vpop.f32.mrb[0].mxu0
        %v2596 = vadd.f32 %v2255, %v2595
        %v2597 = vpop.f32.mrb[0].mxu0
        %v2598 = vadd.f32 %v2259, %v2597
        %2599 = vmatprep.mubr.bf16.mxu0 0
        %2600 = vmatmul.mubr.bf16.gmra.mrb[0].mxu0 %v2205
        %v2601 = vpop.f32.mrb[0].mxu0
        %v2602 = vadd.f32 %v2255, %v2601
        %v2603 = vpop.f32.mrb[0].mxu0
        %v2604 = vadd.f32 %v2259, %v2603
        %v2605 = vpop.f32.mrb[0].mxu0
        %v2606 = vadd.f32 %v2255, %v2605
        %v2607 = vpop.f32.mrb[0].mxu0
        %v2608 = vadd.f32 %v2259, %v2607
        %2609 = vmatprep.mubr.bf16.mxu0 0
        %2610 = vmatmul.mubr.bf16.gmra.mrb[0].mxu0 %v2206
        %v2611 = vpop.f32.mrb[0].mxu0
        %v2612 = vadd.f32 %v2255, %v2611
        %v2613 = vpop.f32.mrb[0].mxu0
        %v2614 = vadd.f32 %v2259, %v2613
        %v2615 = vpop.f32.mrb[0].mxu0
        %v2616 = vadd.f32 %v2255, %v2615
        %v2617 = vpop.f32.mrb[0].mxu0
        %v2618 = vadd.f32 %v2259, %v2617
        %2619 = vmatprep.mubr.bf16.mxu0 0
        %2620 = vmatmul.mubr.bf16.gmra.mrb[0].mxu0 %v2207
        %v2621 = vpop.f32.mrb[0].mxu0
        %v2622 = vadd.f32 %v2255, %v2621
        %v2623 = vpop.f32.mrb[0].mxu0
        %v2624 = vadd.f32 %v2259, %v2623
        %v2625 = vpop.f32.mrb[0].mxu0
        %v2626 = vadd.f32 %v2255, %v2625
        %v2627 = vpop.f32.mrb[0].mxu0
        %v2628 = vadd.f32 %v2259, %v2627
        %2629 = vmatprep.mubr.bf16.mxu0 0
        %2630 = vmatmul.mubr.bf16.gmra.mrb[0].mxu0 %v2208
        %v2631 = vpop.f32.mrb[0].mxu0
        %v2632 = vadd.f32 %v2255, %v2631
        %v2633 = vpop.f32.mrb[0].mxu0
        %v2634 = vadd.f32 %v2259, %v2633
        %v2635 = vpop.f32.mrb[0].mxu0
        %v2636 = vadd.f32 %v2255, %v2635
        %v2637 = vpop.f32.mrb[0].mxu0
        %v2638 = vadd.f32 %v2259, %v2637
        %2639 = vmatprep.mubr.bf16.mxu0 0
        %2640 = vmatmul.mubr.bf16.gmra.mrb[0].mxu0 %v2209
        %v2641 = vpop.f32.mrb[0].mxu0
        %v2642 = vadd.f32 %v2255, %v2641
        %v2643 = vpop.f32.mrb[0].mxu0
        %v2644 = vadd.f32 %v2259, %v2643
        %v2645 = vpop.f32.mrb[0].mxu0
        %v2646 = vadd.f32 %v2255, %v2645
        %v2647 = vpop.f32.mrb[0].mxu0
        %v2648 = vadd.f32 %v2259, %v2647
        %2649 = vdwg.mxu0
        %v2650 = vmul.f32 %v2459, 0.2
        %v2651 = vmul.f32 %v2461, 0.2
        %v2652 = vmul.f32 %v2572, 0.2
        %v2653 = vmul.f32 %v2574, 0.2
        %v2654 = vmul.f32 %v2463, 0.2
        %v2655 = vmul.f32 %v2465, 0.2
        %v2656 = vmul.f32 %v2576, 0.2
        %v2657 = vmul.f32 %v2578, 0.2
        %v2658 = vmul.f32 %v2469, 0.2
        %v2659 = vmul.f32 %v2471, 0.2
        %v2660 = vmul.f32 %v2582, 0.2
        %v2661 = vmul.f32 %v2584, 0.2
        %v2662 = vmul.f32 %v2473, 0.2
        %v2663 = vmul.f32 %v2475, 0.2
        %v2664 = vmul.f32 %v2586, 0.2
        %v2665 = vmul.f32 %v2588, 0.2
        %v2666 = vmul.f32 %v2479, 0.2
        %v2667 = vmul.f32 %v2481, 0.2
        %v2668 = vmul.f32 %v2592, 0.2
        %v2669 = vmul.f32 %v2594, 0.2
        %v2670 = vmul.f32 %v2483, 0.2
        %v2671 = vmul.f32 %v2485, 0.2
        %v2672 = vmul.f32 %v2596, 0.2
        %v2673 = vmul.f32 %v2598, 0.2
        %v2674 = vmul.f32 %v2489, 0.2
        %v2675 = vmul.f32 %v2491, 0.2
        %v2676 = vmul.f32 %v2602, 0.2
        %v2677 = vmul.f32 %v2604, 0.2
        %v2678 = vmul.f32 %v2493, 0.2
        %v2679 = vmul.f32 %v2495, 0.2
        %v2680 = vmul.f32 %v2606, 0.2
        %v2681 = vmul.f32 %v2608, 0.2
        %v2682 = vmul.f32 %v2499, 0.2
        %v2683 = vmul.f32 %v2501, 0.2
        %v2684 = vmul.f32 %v2612, 0.2
        %v2685 = vmul.f32 %v2614, 0.2
        %v2686 = vmul.f32 %v2503, 0.2
        %v2687 = vmul.f32 %v2505, 0.2
        %v2688 = vmul.f32 %v2616, 0.2
        %v2689 = vmul.f32 %v2618, 0.2
        %v2690 = vmul.f32 %v2509, 0.2
        %v2691 = vmul.f32 %v2511, 0.2
        %v2692 = vmul.f32 %v2622, 0.2
        %v2693 = vmul.f32 %v2624, 0.2
        %v2694 = vmul.f32 %v2513, 0.2
        %v2695 = vmul.f32 %v2515, 0.2
        %v2696 = vmul.f32 %v2626, 0.2
        %v2697 = vmul.f32 %v2628, 0.2
        %v2698 = vmul.f32 %v2519, 0.2
        %v2699 = vmul.f32 %v2521, 0.2
        %v2700 = vmul.f32 %v2632, 0.2
        %v2701 = vmul.f32 %v2634, 0.2
        %v2702 = vmul.f32 %v2523, 0.2
        %v2703 = vmul.f32 %v2525, 0.2
        %v2704 = vmul.f32 %v2636, 0.2
        %v2705 = vmul.f32 %v2638, 0.2
        %v2706 = vmul.f32 %v2529, 0.2
        %v2707 = vmul.f32 %v2531, 0.2
        %v2708 = vmul.f32 %v2642, 0.2
        %v2709 = vmul.f32 %v2644, 0.2
        %v2710 = vmul.f32 %v2533, 0.2
        %v2711 = vmul.f32 %v2535, 0.2
        %v2712 = vmul.f32 %v2646, 0.2
        %v2713 = vmul.f32 %v2648, 0.2
        %v2714 = vadd.f32 %v2650, %v413
        %v2715 = vadd.f32 %v2651, %v414
        %v2716 = vadd.f32 %v2652, %v415
        %v2717 = vadd.f32 %v2653, %v416
        %v2718 = vadd.f32 %v2654, %v417
        %v2719 = vadd.f32 %v2655, %v418
        %v2720 = vadd.f32 %v2656, %v419
        %v2721 = vadd.f32 %v2657, %v420
        %v2722 = vadd.f32 %v2658, %v421
        %v2723 = vadd.f32 %v2659, %v422
        %v2724 = vadd.f32 %v2660, %v423
        %v2725 = vadd.f32 %v2661, %v424
        %v2726 = vadd.f32 %v2662, %v425
        %v2727 = vadd.f32 %v2663, %v426
        %v2728 = vadd.f32 %v2664, %v427
        %v2729 = vadd.f32 %v2665, %v428
        %v2730 = vadd.f32 %v2666, %v429
        %v2731 = vadd.f32 %v2667, %v430
        %v2732 = vadd.f32 %v2668, %v431
        %v2733 = vadd.f32 %v2669, %v432
        %v2734 = vadd.f32 %v2670, %v433
        %v2735 = vadd.f32 %v2671, %v434
        %v2736 = vadd.f32 %v2672, %v435
        %v2737 = vadd.f32 %v2673, %v436
        %v2738 = vadd.f32 %v2674, %v437
        %v2739 = vadd.f32 %v2675, %v438
        %v2740 = vadd.f32 %v2676, %v439
        %v2741 = vadd.f32 %v2677, %v440
        %v2742 = vadd.f32 %v2678, %v441
        %v2743 = vadd.f32 %v2679, %v442
        %v2744 = vadd.f32 %v2680, %v443
        %v2745 = vadd.f32 %v2681, %v444
        %v2746 = vadd.f32 %v2682, %v445
        %v2747 = vadd.f32 %v2683, %v446
        %v2748 = vadd.f32 %v2684, %v447
        %v2749 = vadd.f32 %v2685, %v448
        %v2750 = vadd.f32 %v2686, %v449
        %v2751 = vadd.f32 %v2687, %v450
        %v2752 = vadd.f32 %v2688, %v451
        %v2753 = vadd.f32 %v2689, %v452
        %v2754 = vadd.f32 %v2690, %v453
        %v2755 = vadd.f32 %v2691, %v454
        %v2756 = vadd.f32 %v2692, %v455
        %v2757 = vadd.f32 %v2693, %v456
        %v2758 = vadd.f32 %v2694, %v457
        %v2759 = vadd.f32 %v2695, %v458
        %v2760 = vadd.f32 %v2696, %v459
        %v2761 = vadd.f32 %v2697, %v460
        %v2762 = vadd.f32 %v2698, %v461
        %v2763 = vadd.f32 %v2699, %v462
        %v2764 = vadd.f32 %v2700, %v463
        %v2765 = vadd.f32 %v2701, %v464
        %v2766 = vadd.f32 %v2702, %v465
        %v2767 = vadd.f32 %v2703, %v466
        %v2768 = vadd.f32 %v2704, %v467
        %v2769 = vadd.f32 %v2705, %v468
        %v2770 = vadd.f32 %v2706, %v469
        %v2771 = vadd.f32 %v2707, %v470
        %v2772 = vadd.f32 %v2708, %v471
        %v2773 = vadd.f32 %v2709, %v472
        %v2774 = vadd.f32 %v2710, %v473
        %v2775 = vadd.f32 %v2711, %v474
        %v2776 = vadd.f32 %v2712, %v475
        %v2777 = vadd.f32 %v2713, %v476
        %2778 = vst [vmem:[%s409] sm:$0xff] %v2714
        %2779 = vst [vmem:[%s409 + $0x8] sm:$0xff] %v2715
        %2780 = vst [vmem:[%s409 + $0x10] sm:$0xff] %v2716
        %2781 = vst [vmem:[%s409 + $0x18] sm:$0xff] %v2717
        %2782 = vst [vmem:[%s409 + $0x20] sm:$0xff] %v2718
        %2783 = vst [vmem:[%s409 + $0x28] sm:$0xff] %v2719
        %2784 = vst [vmem:[%s409 + $0x30] sm:$0xff] %v2720
        %2785 = vst [vmem:[%s409 + $0x38] sm:$0xff] %v2721
        %2786 = vst [vmem:[%s409 + $0x40] sm:$0xff] %v2722
        %2787 = vst [vmem:[%s409 + $0x48] sm:$0xff] %v2723
        %2788 = vst [vmem:[%s409 + $0x50] sm:$0xff] %v2724
        %2789 = vst [vmem:[%s409 + $0x58] sm:$0xff] %v2725
        %2790 = vst [vmem:[%s409 + $0x60] sm:$0xff] %v2726
        %2791 = vst [vmem:[%s409 + $0x68] sm:$0xff] %v2727
        %2792 = vst [vmem:[%s409 + $0x70] sm:$0xff] %v2728
        %2793 = vst [vmem:[%s409 + $0x78] sm:$0xff] %v2729
        %2794 = vst [vmem:[%s409 + $0x80] sm:$0xff] %v2730
        %2795 = vst [vmem:[%s409 + $0x88] sm:$0xff] %v2731
        %2796 = vst [vmem:[%s409 + $0x90] sm:$0xff] %v2732
        %2797 = vst [vmem:[%s409 + $0x98] sm:$0xff] %v2733
        %2798 = vst [vmem:[%s409 + $0xa0] sm:$0xff] %v2734
        %2799 = vst [vmem:[%s409 + $0xa8] sm:$0xff] %v2735
        %2800 = vst [vmem:[%s409 + $0xb0] sm:$0xff] %v2736
        %2801 = vst [vmem:[%s409 + $0xb8] sm:$0xff] %v2737
        %2802 = vst [vmem:[%s409 + $0xc0] sm:$0xff] %v2738
        %2803 = vst [vmem:[%s409 + $0xc8] sm:$0xff] %v2739
        %2804 = vst [vmem:[%s409 + $0xd0] sm:$0xff] %v2740
        %2805 = vst [vmem:[%s409 + $0xd8] sm:$0xff] %v2741
        %2806 = vst [vmem:[%s409 + $0xe0] sm:$0xff] %v2742
        %2807 = vst [vmem:[%s409 + $0xe8] sm:$0xff] %v2743
        %2808 = vst [vmem:[%s409 + $0xf0] sm:$0xff] %v2744
        %2809 = vst [vmem:[%s409 + $0xf8] sm:$0xff] %v2745
        %2810 = vst [vmem:[%s409 + $0x100] sm:$0xff] %v2746
        %2811 = vst [vmem:[%s409 + $0x108] sm:$0xff] %v2747
        %2812 = vst [vmem:[%s409 + $0x110] sm:$0xff] %v2748
        %2813 = vst [vmem:[%s409 + $0x118] sm:$0xff] %v2749
        %2814 = vst [vmem:[%s409 + $0x120] sm:$0xff] %v2750
        %2815 = vst [vmem:[%s409 + $0x128] sm:$0xff] %v2751
        %2816 = vst [vmem:[%s409 + $0x130] sm:$0xff] %v2752
        %2817 = vst [vmem:[%s409 + $0x138] sm:$0xff] %v2753
        %2818 = vst [vmem:[%s409 + $0x140] sm:$0xff] %v2754
        %2819 = vst [vmem:[%s409 + $0x148] sm:$0xff] %v2755
        %2820 = vst [vmem:[%s409 + $0x150] sm:$0xff] %v2756
        %2821 = vst [vmem:[%s409 + $0x158] sm:$0xff] %v2757
        %2822 = vst [vmem:[%s409 + $0x160] sm:$0xff] %v2758
        %2823 = vst [vmem:[%s409 + $0x168] sm:$0xff] %v2759
        %2824 = vst [vmem:[%s409 + $0x170] sm:$0xff] %v2760
        %2825 = vst [vmem:[%s409 + $0x178] sm:$0xff] %v2761
        %2826 = vst [vmem:[%s409 + $0x180] sm:$0xff] %v2762
        %2827 = vst [vmem:[%s409 + $0x188] sm:$0xff] %v2763
        %2828 = vst [vmem:[%s409 + $0x190] sm:$0xff] %v2764
        %2829 = vst [vmem:[%s409 + $0x198] sm:$0xff] %v2765
        %2830 = vst [vmem:[%s409 + $0x1a0] sm:$0xff] %v2766
        %2831 = vst [vmem:[%s409 + $0x1a8] sm:$0xff] %v2767
        %2832 = vst [vmem:[%s409 + $0x1b0] sm:$0xff] %v2768
        %2833 = vst [vmem:[%s409 + $0x1b8] sm:$0xff] %v2769
        %2834 = vst [vmem:[%s409 + $0x1c0] sm:$0xff] %v2770
        %2835 = vst [vmem:[%s409 + $0x1c8] sm:$0xff] %v2771
        %2836 = vst [vmem:[%s409 + $0x1d0] sm:$0xff] %v2772
        %2837 = vst [vmem:[%s409 + $0x1d8] sm:$0xff] %v2773
        %2838 = vst [vmem:[%s409 + $0x1e0] sm:$0xff] %v2774
        %2839 = vst [vmem:[%s409 + $0x1e8] sm:$0xff] %v2775
        %2840 = vst [vmem:[%s409 + $0x1f0] sm:$0xff] %v2776
        %2841 = vst [vmem:[%s409 + $0x1f8] sm:$0xff] %v2777
        %s2842 = sand.u32 %s230, 1
        %s2843 = scalar_lea.sflag [#allocation4], %s2842
        %s2844 = sand.u32 %s230, 1
        %s2845 = smul.addr %s2844, 512
        %s2846 = scalar_lea.vmem [#allocation11], %s2845
        // Predicated region
        $region77: #{tpu_custom_call.1} parent=55 // pred_check
          %p2847 = pneg %p240
        $region78: #{tpu_custom_call.1} parent=55 // pred_check_branch
          %2849 = sbr.rel (%p2847) target = $region80
        $region79: #{tpu_custom_call.1} parent=55 // pred_region
          %s2850 = smul.u32 16, %s28
          %s2852 = ssub.s32 8192, 8192
          %2853 = vsyncadd %s2843, %s2852
          %s2854 = smul.addr %s2850, 4
          %s2855 = smul.addr %s2854, 128
          %s2856 = scalar_lea.hbm %s9, %s2855
          %s2857 = sshll.u32 %s2846, 4
          %s2858 = int_to_ptr.vmem [resolvable:$true] %s2857
          %2863 = dma.vmem_to_hbm [thread:$0]  %s2858, 8192, %s2856, %s2843, 512, 512, 32
        $region80: #{tpu_custom_call.1} parent=55 // pred_fallthru
          _
      $region56: #{tpu_custom_call.1} parent=5 // pred_fallthru
        _
      %p2864 = scmp.le.s32.totalorder 2, %s23
      // Predicated region
      $region81: #{tpu_custom_call.1} parent=5 // pred_check
        %p2865 = pneg %p2864
      $region82: #{tpu_custom_call.1} parent=5 // pred_check_branch
        %2867 = sbr.rel (%p2865) target = $region84
      $region83: #{tpu_custom_call.1} parent=5 // pred_region
        %s2868 = ssub.s32 %s23, 2
        // Predicated region
        $region85: #{tpu_custom_call.1} parent=83 // pred_check
          %p2869 = pneg %p246
        $region86: #{tpu_custom_call.1} parent=83 // pred_check_branch
          %2871 = sbr.rel (%p2869) target = $region88
        $region87: #{tpu_custom_call.1} parent=83 // pred_region
          %s2872 = sand.u32 %s231, 1
          %s2873 = scalar_lea.sflag [#allocation4], %s2872
          %s2874 = sand.u32 %s231, 1
          %s2875 = smul.addr %s2874, 512
          %s2876 = scalar_lea.vmem [#allocation11], %s2875
          %2877 = dma.done %s2873, 8192
        $region88: #{tpu_custom_call.1} parent=83 // pred_fallthru
          _
      $region84: #{tpu_custom_call.1} parent=5 // pred_fallthru
        _
    $region6: #{tpu_custom_call.1} parent=1 // loop_footer
      %s27 = sadd.s32 1, %s23
    $region7: #{tpu_custom_call.1} parent=1 // loop_footer_branch
      %22 = sbr.rel target = $region3
    $region8: #{tpu_custom_call.1} parent=1 // loop_exit
      _
    %2878 = vsyncpa [#allocation3], 1
    %s2879 = scalar_lea.sflag [#allocation3], 1
    %2880 = vsyncpa %s2879, 1
    %2881 = vsyncpa [#allocation6], 1
    %2882 = vsyncpa [#allocation9], 1
    %2883 = vsyncpa [#allocation4], 1
    %s2884 = scalar_lea.sflag [#allocation4], 1
    %2885 = vsyncpa %s2884, 1

</llo_original>
